<compile_context>
chip_gen: v7x
topology: tpu7x:2x2x1
jax: 0.10.0
libtpu: 0.0.40
codegen_flags: <defaults>
</compile_context>

<pallas_src>
import jax
import jax.numpy as jnp
from jax.experimental import pallas as pl
from jax.experimental.pallas import tpu as pltpu


def sp_kernel(x_ref, d_ref, o_ref):
    # x_ref: (rt, 2W)       fused row-pairs; lanes [0, W) = even image row,
    #                       lanes [W, 2W) = odd image row (row parity is free).
    # d_ref: (W, W)         0/1 column de-interleave matrix (constant block).
    # o_ref: (2, 2, rt, W2) indexed [col_parity, row_parity].
    rt, two_w = x_ref.shape
    w = two_w // 2
    w2 = w // 2

    prec = (jax.lax.Precision.HIGHEST if x_ref.dtype == jnp.float32
            else jax.lax.Precision.DEFAULT)

    x = x_ref[...]
    d = d_ref[...]

    # Column de-interleave of each row-parity half: output cols [0, W2) are the
    # even input cols, [W2, W) the odd input cols.  0/1 matrix => exact copy.
    re = jnp.dot(x[:, :w], d, precision=prec, preferred_element_type=o_ref.dtype)
    ro = jnp.dot(x[:, w:], d, precision=prec, preferred_element_type=o_ref.dtype)

    o_ref[0, 0] = re[:, :w2]   # even row, even col  -> LL (block 0)
    o_ref[0, 1] = ro[:, :w2]   # odd  row, even col  -> HL (block 1)
    o_ref[1, 0] = re[:, w2:]   # even row, odd  col  -> LH (block 2)
    o_ref[1, 1] = ro[:, w2:]   # odd  row, odd  col  -> HH (block 3)


def _pick_row_tile(B, R, row_bytes, target_bytes=2 << 20):
    """Rows (of the fused (R, 2W) view) per grid step.

    rt must be a multiple of 8 (sublane tiling) dividing R, or R itself.
    Sized to ~2 MiB of input per block (near the measured HBM-roofline sweet
    spot on all generations), and capped so the grid keeps >= 2 parallel steps
    (v7x has two TensorCores; also gives the DMA pipeline depth).
    """
    cap = min(R, max(8, target_bytes // max(1, row_bytes)))
    best = None
    d = 8
    while d <= cap:
        if R % d == 0:
            best = d
        d += 8
    # Fallback: whole fused axis in one block (correct; only hit when C*H2 has
    # no multiple-of-8 divisor, which is rare for real image shapes).
    rt = best if best is not None else R

    if B * (R // rt) < 2:          # keep both v7x cores busy even at B=1
        d, half = 8, None
        while d <= R // 2:
            if R % d == 0:
                half = d
            d += 8
        if half is not None:
            rt = half
    return rt


def sp(x):
    """x: (B, C, H, W) -> (B, 4C, H//2, W//2), same dtype (matches sp_init)."""
    B, C, H, W = x.shape
    assert H % 2 == 0 and W % 2 == 0, "SP kernel requires even H and W"
    assert jnp.issubdtype(x.dtype, jnp.floating), "SP kernel requires float dtype"
    H2, W2 = H // 2, W // 2
    R = C * H2
    dt = x.dtype
    itemsize = jnp.dtype(dt).itemsize

    rt = _pick_row_tile(B, R, 2 * W * itemsize)

    # Column de-interleave matrix D (W, W): D[w, n] = 1 iff w == src(n), where
    # output column n = cp*W2 + j reads input column src = 2j + cp.
    n = jnp.arange(W)
    src = 2 * (n % W2) + n // W2
    D = (jnp.arange(W)[:, None] == src[None, :]).astype(dt)

    # Free contiguous reshape: fused row q = c*H2 + i holds image rows 2i, 2i+1
    # of channel c back to back on the lane axis.
    x_r = x.reshape(B, R, 2 * W)

    nbytes = x.size * itemsize
    cost = pl.CostEstimate(
        # Only the two (rt, W) x (W, W) de-interleave matmuls per block; this
        # op is essentially data movement.
        flops=4 * B * R * W * W,
        transcendentals=0,
        bytes_accessed=2 * nbytes + W * W * itemsize,
    )

    grid = (B, R // rt)

    out = pl.pallas_call(
        sp_kernel,
        out_shape=jax.ShapeDtypeStruct((B, 2, 2, R, W2), dt),
        grid=grid,
        in_specs=[
            pl.BlockSpec((None, rt, 2 * W), lambda b, r: (b, r, 0)),
            # Constant index_map: fetched once, never re-DMA'd across the grid.
            pl.BlockSpec((W, W), lambda b, r: (0, 0)),
        ],
        out_specs=pl.BlockSpec((None, 2, 2, rt, W2),
                               lambda b, r: (b, 0, 0, r, 0)),
        compiler_params=pltpu.CompilerParams(
            dimension_semantics=("parallel", "parallel")),
        cost_estimate=cost,
    )(x_r, D)

    # Free contiguous reshape: (cp, rp, c*H2) -> channel blocks ordered
    # [LL, HL, LH, HH] (block index = 2*cp + rp), matching torch.cat(dim=1).
    return out.reshape(B, 4 * C, H2, W2)


def sp_ref(x):
    """Pure-JAX reference mirroring the PyTorch sp_init."""
    x01 = x[:, :, 0::2, :]
    x02 = x[:, :, 1::2, :]
    x_LL = x01[:, :, :, 0::2]
    x_HL = x02[:, :, :, 0::2]
    x_LH = x01[:, :, :, 1::2]
    x_HH = x02[:, :, :, 1::2]
    return jnp.concatenate((x_LL, x_HL, x_LH, x_HH), axis=1)


if __name__ == "__main__":
    key = jax.random.PRNGKey(0)
    B, C, H, W = 2, 4, 16, 16  # -> output (2, 16, 8, 8)
    x = jax.random.normal(key, (B, C, H, W), dtype=jnp.float32)

    out = jax.block_until_ready(sp(x))
    ref = sp_ref(x)

    assert out.shape == (B, 4 * C, H // 2, W // 2), out.shape
    assert out.dtype == x.dtype
    assert jnp.allclose(out, ref, atol=0.0, rtol=0.0) or jnp.allclose(
        out, ref, atol=1e-6, rtol=1e-6
    ), "mismatch vs reference"

    print("KERNEL_OK")
</pallas_src>

<mosaic_0001>
module attributes {stable_mosaic.version = 11 : i64} {
  func.func @sp_kernel(%arg0: i32, %arg1: i32, %arg2: memref<1x32x32xf32, #tpu.memory_space<vmem>>, %arg3: memref<16x16xf32, #tpu.memory_space<vmem>>, %arg4: memref<1x2x2x32x8xf32, #tpu.memory_space<vmem>>) attributes {dimension_semantics = [#tpu.dimension_semantics<parallel>, #tpu.dimension_semantics<parallel>], iteration_bounds = array<i64: 2, 1>, scalar_prefetch = 0 : i64, scratch_operands = 0 : i64, tpu.core_type = #tpu.core_type<tc>, window_params = [{transform_indices = @transform_0, window_bounds = array<i64: 1, 32, 32>}, {pipeline_mode = #tpu.pipeline_mode<synchronous>, transform_indices = @transform_1, window_bounds = array<i64: 16, 16>}, {transform_indices = @transform_2, window_bounds = array<i64: 1, 2, 2, 32, 8>}]} {
    %c0 = arith.constant 0 : index
    %c0_0 = arith.constant 0 : index
    %c0_1 = arith.constant 0 : index
    %0 = vector.load %arg2[%c0, %c0_0, %c0_1] : memref<1x32x32xf32, #tpu.memory_space<vmem>>, vector<1x32x32xf32>
    %1 = vector.shape_cast %0 : vector<1x32x32xf32> to vector<32x32xf32>
    %c0_2 = arith.constant 0 : index
    %c0_3 = arith.constant 0 : index
    %2 = vector.load %arg3[%c0_2, %c0_3] : memref<16x16xf32, #tpu.memory_space<vmem>>, vector<16x16xf32>
    %3 = vector.extract_strided_slice %1 {offsets = [0, 0], sizes = [32, 16], strides = [1, 1]} : vector<32x32xf32> to vector<32x16xf32>
    %cst = arith.constant dense<0.000000e+00> : vector<32x16xf32>
    %4 = tpu.matmul %3, %2, %cst {dimension_numbers = #tpu.dot_dimension_numbers<[1], [0], [0], [1], [0, 0, 1, 1], [], []>, precision = #tpu.contract_precision<fp32>} : vector<32x16xf32>, vector<16x16xf32>, vector<32x16xf32> -> vector<32x16xf32>
    %5 = vector.extract_strided_slice %1 {offsets = [0, 16], sizes = [32, 16], strides = [1, 1]} : vector<32x32xf32> to vector<32x16xf32>
    %cst_4 = arith.constant dense<0.000000e+00> : vector<32x16xf32>
    %6 = tpu.matmul %5, %2, %cst_4 {dimension_numbers = #tpu.dot_dimension_numbers<[1], [0], [0], [1], [0, 0, 1, 1], [], []>, precision = #tpu.contract_precision<fp32>} : vector<32x16xf32>, vector<16x16xf32>, vector<32x16xf32> -> vector<32x16xf32>
    %7 = vector.extract_strided_slice %4 {offsets = [0, 0], sizes = [32, 8], strides = [1, 1]} : vector<32x16xf32> to vector<32x8xf32>
    %c0_5 = arith.constant 0 : index
    %c0_6 = arith.constant 0 : index
    %c0_7 = arith.constant 0 : index
    %c0_8 = arith.constant 0 : index
    %c0_9 = arith.constant 0 : index
    %8 = vector.load %arg4[%c0_5, %c0_6, %c0_7, %c0_8, %c0_9] : memref<1x2x2x32x8xf32, #tpu.memory_space<vmem>>, vector<1x1x1x32x8xf32>
    %9 = vector.shape_cast %8 : vector<1x1x1x32x8xf32> to vector<32x8xf32>
    %10 = vector.shape_cast %7 : vector<32x8xf32> to vector<1x1x1x32x8xf32>
    tpu.vector_store %arg4[%c0_5, %c0_6, %c0_7, %c0_8, %c0_9], %10 {strides = array<i32>} : memref<1x2x2x32x8xf32, #tpu.memory_space<vmem>>, vector<1x1x1x32x8xf32>,
    %11 = vector.extract_strided_slice %6 {offsets = [0, 0], sizes = [32, 8], strides = [1, 1]} : vector<32x16xf32> to vector<32x8xf32>
    %c0_10 = arith.constant 0 : index
    %c0_11 = arith.constant 0 : index
    %c1 = arith.constant 1 : index
    %c0_12 = arith.constant 0 : index
    %c0_13 = arith.constant 0 : index
    %12 = vector.load %arg4[%c0_10, %c0_11, %c1, %c0_12, %c0_13] : memref<1x2x2x32x8xf32, #tpu.memory_space<vmem>>, vector<1x1x1x32x8xf32>
    %13 = vector.shape_cast %12 : vector<1x1x1x32x8xf32> to vector<32x8xf32>
    %14 = vector.shape_cast %11 : vector<32x8xf32> to vector<1x1x1x32x8xf32>
    tpu.vector_store %arg4[%c0_10, %c0_11, %c1, %c0_12, %c0_13], %14 {strides = array<i32>} : memref<1x2x2x32x8xf32, #tpu.memory_space<vmem>>, vector<1x1x1x32x8xf32>,
    %15 = vector.extract_strided_slice %4 {offsets = [0, 8], sizes = [32, 8], strides = [1, 1]} : vector<32x16xf32> to vector<32x8xf32>
    %c0_14 = arith.constant 0 : index
    %c1_15 = arith.constant 1 : index
    %c0_16 = arith.constant 0 : index
    %c0_17 = arith.constant 0 : index
    %c0_18 = arith.constant 0 : index
    %16 = vector.load %arg4[%c0_14, %c1_15, %c0_16, %c0_17, %c0_18] : memref<1x2x2x32x8xf32, #tpu.memory_space<vmem>>, vector<1x1x1x32x8xf32>
    %17 = vector.shape_cast %16 : vector<1x1x1x32x8xf32> to vector<32x8xf32>
    %18 = vector.shape_cast %15 : vector<32x8xf32> to vector<1x1x1x32x8xf32>
    tpu.vector_store %arg4[%c0_14, %c1_15, %c0_16, %c0_17, %c0_18], %18 {strides = array<i32>} : memref<1x2x2x32x8xf32, #tpu.memory_space<vmem>>, vector<1x1x1x32x8xf32>,
    %19 = vector.extract_strided_slice %6 {offsets = [0, 8], sizes = [32, 8], strides = [1, 1]} : vector<32x16xf32> to vector<32x8xf32>
    %c0_19 = arith.constant 0 : index
    %c1_20 = arith.constant 1 : index
    %c1_21 = arith.constant 1 : index
    %c0_22 = arith.constant 0 : index
    %c0_23 = arith.constant 0 : index
    %20 = vector.load %arg4[%c0_19, %c1_20, %c1_21, %c0_22, %c0_23] : memref<1x2x2x32x8xf32, #tpu.memory_space<vmem>>, vector<1x1x1x32x8xf32>
    %21 = vector.shape_cast %20 : vector<1x1x1x32x8xf32> to vector<32x8xf32>
    %22 = vector.shape_cast %19 : vector<32x8xf32> to vector<1x1x1x32x8xf32>
    tpu.vector_store %arg4[%c0_19, %c1_20, %c1_21, %c0_22, %c0_23], %22 {strides = array<i32>} : memref<1x2x2x32x8xf32, #tpu.memory_space<vmem>>, vector<1x1x1x32x8xf32>,
    return
  }
  func.func @transform_0(%arg0: i32, %arg1: i32) -> (i32, i32, i32) {
    %c0_i32 = arith.constant 0 : i32
    %c0_i32_0 = arith.constant 0 : i32
    return %arg0, %arg1, %c0_i32 : i32, i32, i32
  }
  func.func @transform_1(%arg0: i32, %arg1: i32) -> (i32, i32) {
    %c0_i32 = arith.constant 0 : i32
    %c0_i32_0 = arith.constant 0 : i32
    %c0_i32_1 = arith.constant 0 : i32
    return %c0_i32, %c0_i32_0 : i32, i32
  }
  func.func @transform_2(%arg0: i32, %arg1: i32) -> (i32, i32, i32, i32, i32) {
    %c0_i32 = arith.constant 0 : i32
    %c0_i32_0 = arith.constant 0 : i32
    %c0_i32_1 = arith.constant 0 : i32
    %c0_i32_2 = arith.constant 0 : i32
    return %arg0, %c0_i32, %c0_i32_0, %arg1, %c0_i32_1 : i32, i32, i32, i32, i32
  }
}

</mosaic_0001>

<llo_original>
// kernel: tpu_custom_call.1
$region0: #{tpu_custom_call.1}
  #allocation0 [shape = 'u32[]', space=smem, size = 0x4, offset = 0x4, fixed_abs, tag = 'smem constant byte address 0x4 - core index']
  #allocation1 [shape = 'u32[144,128]{1,0:T(1,128)}', space=vmem, size = 0x12000, scoped, tag = 'internal scratch']
  %s0 = inlined_call_operand.hbm [shape: f32[2,32,32], index: 0, kind: input, shape index: {}]
  %s1 = inlined_call_operand.hbm [shape: f32[16,16], index: 1, kind: input, shape index: {}]
  %s2 = inlined_call_operand.vmem [shape: f32[2,2,2,32,8], index: 2, kind: output, shape index: {}]
  %s3 = sld [smem:[#allocation0]]
  $region49: #{tpu_custom_call.1} parent=0
    _
  %s5 = ssub.s32 1, %s3
  %s6 = scalar_select 0, %s5, %s3
  $region1: #{tpu_custom_call.1} parent=0
    #allocation2 [shape = 'u8[32768]{0}', space=vmem, size = 0x8000, scoped, tag = 'input window, operand 0']
    #allocation3 [shape = 's32[2]{0}', space=sflag, size = 0x8, scoped, tag = 'scoped memory for tpu_custom_call.1']
    #allocation4 [shape = 'u8[8192]{0}', space=vmem, size = 0x2000, scoped, tag = 'input window, operand 1, single buffered']
    #allocation5 [shape = 's32[1]{0}', space=sflag, size = 0x4, scoped, tag = 'scoped memory for tpu_custom_call.1']
    %7 = vsyncpa [#allocation3], 0
    %s8 = scalar_lea.sflag [#allocation3], 1
    %9 = vsyncpa %s8, 0
    %10 = vsyncpa [#allocation5], 0
    loop: start=0, step=1, limit=4
    $region2: #{tpu_custom_call.1} parent=1 // loop_pre_header
      _
    $region3: #{tpu_custom_call.1} parent=1 // loop_header
      %s12 = sphi 0, %s16
      %p13 = scmp.ge.s32.totalorder %s12, 4
      %s19 = sphi 0, %s31
      %s20 = sphi 0, %s27
      %s21 = sphi 0, %s19
      %s22 = sphi 0, %s20
      %s23 = sphi 0, %s21
      %s24 = sphi 0, %s22
      %s36 = sphi 0, %s38
      %s39 = sphi 0, %s36
      %s40 = sphi 0, %s39
      %s56 = sphi 0, %s40
      %s60 = sphi 0, %s60
      %s62 = sphi 0, %s60
      %s63 = sphi 0, %s62
      %s77 = sphi 0, %s63
      %s85 = sphi 0, %s87
      %s88 = sphi 0, %s85
      %s89 = sphi 0, %s88
      %s105 = sphi 0, %s89
    $region4: #{tpu_custom_call.1} parent=1 // loop_header_branch
      %15 = sbr.rel (%p13) target = $region8
    $region5: #{tpu_custom_call.1} parent=1 // loop_body
      %s17 = ssub.s32 %s12, 1
      %s18 = ssub.s32 %s12, 2
      %s25 = sadd.s32 1, %s20
      %p26 = scmp.ge.s32.totalorder %s25, 1
      %s27 = scalar_select %p26, 0, %s25
      %s28 = sadd.s32 1, %s19
      %s29 = scalar_select %p26, %s28, %s19
      %p30 = scmp.ge.s32.totalorder %s29, 2
      %s31 = scalar_select %p30, 0, %s29
      %s32 = ssub.s32 %s19, %s31
      %s33 = ssub.s32 %s20, %s27
      %s34 = sor.u32 %s32, %s33
      %p35 = scmp.eq.s32.totalorder %s34, 0
      %s37 = sadd.s32 %s36, 1
      %s38 = scalar_select %p35, %s36, %s37
      %p41 = pneg %p35
      %p42 = scmp.eq.s32.totalorder %s12, 1
      %p43 = por %p41, %p42
      %p44 = scmp.ne.s32.totalorder %s36, %s39
      %p45 = scmp.eq.s32.totalorder %s12, 0
      %p46 = por %p44, %p45
      %p47 = scmp.ne.s32.totalorder %s36, %s39
      %p48 = scmp.eq.s32.totalorder %s17, 1
      %p49 = por %p47, %p48
      %p50 = scmp.ne.s32.totalorder %s39, %s40
      %p51 = scmp.eq.s32.totalorder %s17, 0
      %p52 = por %p50, %p51
      %p53 = scmp.ne.s32.totalorder %s39, %s40
      %p54 = scmp.eq.s32.totalorder %s18, 1
      %p55 = por %p53, %p54
      %p57 = scmp.ne.s32.totalorder %s40, %s56
      %p58 = scmp.eq.s32.totalorder %s18, 0
      %p59 = por %p57, %p58
      %s61 = sadd.s32 %s60, 1
      %p64 = scmp.eq.s32.totalorder %s12, 1
      %p65 = scmp.ne.s32.totalorder %s60, %s62
      %p66 = scmp.eq.s32.totalorder %s12, 0
      %p67 = por %p65, %p66
      %p68 = scmp.ne.s32.totalorder %s60, %s62
      %p69 = scmp.eq.s32.totalorder %s17, 1
      %p70 = por %p68, %p69
      %p71 = scmp.ne.s32.totalorder %s62, %s63
      %p72 = scmp.eq.s32.totalorder %s17, 0
      %p73 = por %p71, %p72
      %p74 = scmp.ne.s32.totalorder %s62, %s63
      %p75 = scmp.eq.s32.totalorder %s18, 1
      %p76 = por %p74, %p75
      %p78 = scmp.ne.s32.totalorder %s63, %s77
      %p79 = scmp.eq.s32.totalorder %s18, 0
      %p80 = por %p78, %p79
      %s81 = ssub.s32 %s19, %s31
      %s82 = ssub.s32 %s20, %s27
      %s83 = sor.u32 %s81, %s82
      %p84 = scmp.eq.s32.totalorder %s83, 0
      %s86 = sadd.s32 %s85, 1
      %s87 = scalar_select %p84, %s85, %s86
      %p90 = pneg %p84
      %p91 = scmp.eq.s32.totalorder %s12, 1
      %p92 = por %p90, %p91
      %p93 = scmp.ne.s32.totalorder %s85, %s88
      %p94 = scmp.eq.s32.totalorder %s12, 0
      %p95 = por %p93, %p94
      %p96 = scmp.ne.s32.totalorder %s85, %s88
      %p97 = scmp.eq.s32.totalorder %s17, 1
      %p98 = por %p96, %p97
      %p99 = scmp.ne.s32.totalorder %s88, %s89
      %p100 = scmp.eq.s32.totalorder %s17, 0
      %p101 = por %p99, %p100
      %p102 = scmp.ne.s32.totalorder %s88, %s89
      %p103 = scmp.eq.s32.totalorder %s18, 1
      %p104 = por %p102, %p103
      %p106 = scmp.ne.s32.totalorder %s89, %s105
      %p107 = scmp.eq.s32.totalorder %s18, 0
      %p108 = por %p106, %p107
      %p109 = scmp.le.s32.totalorder 1, %s12
      %p110 = scmp.lt.s32.totalorder %s12, 3
      %p111 = pnand %p109, %p110
      %p112 = pneg %p111
      // Predicated region
      $region9: #{tpu_custom_call.1} parent=5 // pred_check
        _
      $region10: #{tpu_custom_call.1} parent=5 // pred_check_branch
        %114 = sbr.rel (%p111) target = $region12
      $region11: #{tpu_custom_call.1} parent=5 // pred_region
        %s115 = ssub.s32 %s12, 1
        // Predicated region
        $region13: #{tpu_custom_call.1} parent=11 // pred_check
          %p116 = pneg %p73
        $region14: #{tpu_custom_call.1} parent=11 // pred_check_branch
          %118 = sbr.rel (%p116) target = $region16
        $region15: #{tpu_custom_call.1} parent=11 // pred_region
          %s120 = ssub.s32 256, 256
          %121 = vsyncadd [#allocation5], %s120
          %s122 = sshll.u32 [#allocation4], 4
          %s123 = int_to_ptr.vmem [resolvable:$true] %s122
          %128 = dma.hbm_to_vmem [thread:$0]  %s1, 256, %s123, [#allocation5], 128, 128, 8
        $region16: #{tpu_custom_call.1} parent=11 // pred_fallthru
          _
      $region12: #{tpu_custom_call.1} parent=5 // pred_fallthru
        _
      %p129 = scmp.lt.s32.totalorder %s12, 2
      // Predicated region
      $region17: #{tpu_custom_call.1} parent=5 // pred_check
        %p130 = pneg %p129
      $region18: #{tpu_custom_call.1} parent=5 // pred_check_branch
        %132 = sbr.rel (%p130) target = $region20
      $region19: #{tpu_custom_call.1} parent=5 // pred_region
        // Predicated region
        $region21: #{tpu_custom_call.1} parent=19 // pred_check
          %p133 = pneg %p46
        $region22: #{tpu_custom_call.1} parent=19 // pred_check_branch
          %135 = sbr.rel (%p133) target = $region24
        $region23: #{tpu_custom_call.1} parent=19 // pred_region
          %s136 = sand.u32 %s36, 1
          %s137 = scalar_lea.sflag [#allocation3], %s136
          %s138 = sand.u32 %s36, 1
          %s139 = smul.addr %s138, 32
          %s140 = scalar_lea.vmem [#allocation2], %s139
          %s141 = smul.u32 4, %s20
          %s143 = ssub.s32 512, 512
          %144 = vsyncadd %s137, %s143
          %s145 = smul.addr %s19, 4
          %s146 = sadd.s32 %s141, %s145
          %s147 = smul.addr %s146, 128
          %s148 = scalar_lea.hbm %s0, %s147
          %s149 = sshll.u32 %s140, 4
          %s150 = int_to_ptr.vmem [resolvable:$true] %s149
          %155 = dma.hbm_to_vmem [thread:$0]  %s148, 512, %s150, %s137, 128, 128, 8
        $region24: #{tpu_custom_call.1} parent=19 // pred_fallthru
          _
      $region20: #{tpu_custom_call.1} parent=5 // pred_fallthru
        _
      %p156 = scmp.le.s32.totalorder 1, %s12
      %p157 = scmp.lt.s32.totalorder %s12, 3
      %p158 = pnand %p156, %p157
      %p159 = pneg %p158
      // Predicated region
      $region25: #{tpu_custom_call.1} parent=5 // pred_check
        _
      $region26: #{tpu_custom_call.1} parent=5 // pred_check_branch
        %161 = sbr.rel (%p158) target = $region28
      $region27: #{tpu_custom_call.1} parent=5 // pred_region
        %s162 = ssub.s32 %s12, 1
        %s163 = sand.u32 %s39, 1
        %s164 = scalar_lea.sflag [#allocation3], %s163
        %s165 = sand.u32 %s39, 1
        %s166 = smul.addr %s165, 32
        %s167 = scalar_lea.vmem [#allocation2], %s166
        // Predicated region
        $region29: #{tpu_custom_call.1} parent=27 // pred_check
          %p168 = pneg %p52
        $region30: #{tpu_custom_call.1} parent=27 // pred_check_branch
          %170 = sbr.rel (%p168) target = $region32
        $region31: #{tpu_custom_call.1} parent=27 // pred_region
          %171 = dma.done %s164, 512
        $region32: #{tpu_custom_call.1} parent=27 // pred_fallthru
          _
        // Predicated region
        $region33: #{tpu_custom_call.1} parent=27 // pred_check
          %p172 = pneg %p73
        $region34: #{tpu_custom_call.1} parent=27 // pred_check_branch
          %174 = sbr.rel (%p172) target = $region36
        $region35: #{tpu_custom_call.1} parent=27 // pred_region
          %175 = dma.done [#allocation5], 256
        $region36: #{tpu_custom_call.1} parent=27 // pred_fallthru
          _
        %s176 = sand.u32 %s39, 1
        %s177 = scalar_lea.sflag [#allocation3], %s176
        %s178 = sand.u32 %s39, 1
        %s179 = smul.addr %s178, 32
        %s180 = scalar_lea.vmem [#allocation2], %s179
        %p181 = pneg %p52
        %p182 = pneg %p49
        %p183 = pneg %p73
        %p184 = pneg %p70
        %p185 = pneg %p101
        %p186 = pneg %p98
        %s187 = smul.u32 4, %s22
        %p188 = scmp.lt.s32.totalorder %s21, 1
        %s189 = scalar_select %p188, %s21, 1
        %p190 = scmp.lt.s32.totalorder %s187, 3
        %s191 = scalar_select %p190, %s187, 3
        %s192 = smul.addr %s189, 16
        %s193 = sadd.s32 %s191, %s192
        %s194 = smul.addr %s193, 8
        %s195 = scalar_lea.vmem %s2, %s194
        %s196 = smul.u32 4, %s22
        %s197 = smul.u32 4, %s22
        %p198 = scmp.lt.s32.totalorder %s21, 1
        %s199 = scalar_select %p198, %s21, 1
        %p200 = scmp.lt.s32.totalorder %s197, 3
        %s201 = scalar_select %p200, %s197, 3
        %s202 = smul.addr %s199, 16
        %s203 = sadd.s32 %s201, %s202
        %s204 = smul.addr %s203, 8
        %s205 = scalar_lea.vmem %s2, %s204
        %s206 = smul.u32 4, %s22
        %v207 = vld [vmem:[%s167] sm:$0xff]
        %v208 = vld [vmem:[%s167 + $0x8] sm:$0xff]
        %v209 = vld [vmem:[%s167 + $0x10] sm:$0xff]
        %v210 = vld [vmem:[%s167 + $0x18] sm:$0xff]
        %v211 = vld [vmem:[#allocation4] sm:$0xff]
        %v212 = vld [vmem:[#allocation4 + $0x8] sm:$0xff]
        %vm213 = vcmask 130048
        %v215 = vsel %vm213, %v207, 0
        %v218 = vsel %vm213, %v208, 0
        %v221 = vsel %vm213, %v209, 0
        %v224 = vsel %vm213, %v210, 0
        %226 = vmatprep.subr.mxu0 0.0
        %v227 = vand.u32 %v211, 4294901760
        %228 = vmatpush1.msra.mxu0 %v227
        %229 = vmatprep.subr.mxu0 0.0
        %v230 = vand.u32 %v212, 4294901760
        %231 = vmatpush1.msra.mxu0 %v230
        %232 = vmatprep.subr.mxu0 0.0
        %233 = vmatpush1.msra.mxu0 0.0
        %234 = vmatprep.subr.mxu0 0.0
        %235 = vmatpush1.msra.mxu0 0.0
        %236 = vmatprep.subr.mxu0 0.0
        %237 = vmatpush1.msra.mxu0 0.0
        %238 = vmatprep.subr.mxu0 0.0
        %239 = vmatpush1.msra.mxu0 0.0
        %240 = vmatprep.subr.mxu0 0.0
        %241 = vmatpush1.msra.mxu0 0.0
        %242 = vmatprep.subr.mxu0 0.0
        %243 = vmatpush1.msra.mxu0 0.0
        %244 = vmatprep.subr.mxu0 0.0
        %245 = vmatpush1.msra.mxu0 0.0
        %246 = vmatprep.subr.mxu0 0.0
        %247 = vmatpush1.msra.mxu0 0.0
        %248 = vmatprep.subr.mxu0 0.0
        %249 = vmatpush1.msra.mxu0 0.0
        %250 = vmatprep.subr.mxu0 0.0
        %251 = vmatpush1.msra.mxu0 0.0
        %252 = vmatprep.subr.mxu0 0.0
        %253 = vmatpush1.msra.mxu0 0.0
        %254 = vmatprep.subr.mxu0 0.0
        %255 = vmatpush1.msra.mxu0 0.0
        %256 = vmatprep.subr.mxu0 0.0
        %257 = vmatpush1.msra.mxu0 0.0
        %258 = vmatprep.subr.mxu0 0.0
        %259 = vmatpush1.msra.mxu0 0.0
        %260 = vmatprep.subr.mxu0 0.0
        %261 = vmatpush1.msra.mxu0 0.0
        %262 = vmatprep.subr.mxu0 0.0
        %263 = vmatpush1.msra.mxu0 0.0
        %264 = vmatprep.subr.mxu0 0.0
        %265 = vmatpush1.msra.mxu0 0.0
        %266 = vmatprep.subr.mxu0 0.0
        %267 = vmatpush1.msra.mxu0 0.0
        %268 = vmatprep.subr.mxu0 0.0
        %269 = vmatpush1.msra.mxu0 0.0
        %270 = vmatprep.subr.mxu0 0.0
        %271 = vmatpush1.msra.mxu0 0.0
        %272 = vmatprep.subr.mxu0 0.0
        %273 = vmatpush1.msra.mxu0 0.0
        %274 = vmatprep.subr.mxu0 0.0
        %275 = vmatpush1.msra.mxu0 0.0
        %276 = vmatprep.subr.mxu0 0.0
        %277 = vmatpush1.msra.mxu0 0.0
        %278 = vmatprep.subr.mxu0 0.0
        %279 = vmatpush1.msra.mxu0 0.0
        %280 = vmatprep.subr.mxu0 0.0
        %281 = vmatpush1.msra.mxu0 0.0
        %282 = vmatprep.subr.mxu0 0.0
        %283 = vmatpush1.msra.mxu0 0.0
        %284 = vmatprep.subr.mxu0 0.0
        %285 = vmatpush1.msra.mxu0 0.0
        %286 = vmatprep.subr.mxu0 0.0
        %287 = vmatpush1.msra.mxu0 0.0
        %288 = vmatprep.subr.mxu0 0.0
        %289 = vmatpush1.msra.mxu0 0.0
        %290 = vmatprep.subr.mxu0 0.0
        %291 = vmatpush1.msra.mxu0 0.0
        %292 = vmatprep.mubr.f32.mxu0 0.0
        %v293 = vand.u32 %v215, 4294901760
        %v294 = vsub.f32 %v215, %v293
        %v295 = vand.u32 %v294, 4294901760
        %v296 = vsub.f32 %v294, %v295
        %v297 = vand.u32 %v296, 4294901760
        %298 = vmatmul.mubr.f32.gmra.mrb[0].mxu0 %v297
        %v299 = vpop.f32.mrb[0].mxu0
        %v300 = vadd.f32 0.0, %v299
        %v301 = vpop.f32.mrb[0].mxu0
        %302 = vmatprep.mubr.f32.mxu0 0.0
        %v303 = vand.u32 %v218, 4294901760
        %v304 = vsub.f32 %v218, %v303
        %v305 = vand.u32 %v304, 4294901760
        %v306 = vsub.f32 %v304, %v305
        %v307 = vand.u32 %v306, 4294901760
        %308 = vmatmul.mubr.f32.gmra.mrb[0].mxu0 %v307
        %v309 = vpop.f32.mrb[0].mxu0
        %v310 = vadd.f32 0.0, %v309
        %v311 = vpop.f32.mrb[0].mxu0
        %312 = vmatprep.mubr.f32.mxu0 0.0
        %v313 = vand.u32 %v221, 4294901760
        %v314 = vsub.f32 %v221, %v313
        %v315 = vand.u32 %v314, 4294901760
        %v316 = vsub.f32 %v314, %v315
        %v317 = vand.u32 %v316, 4294901760
        %318 = vmatmul.mubr.f32.gmra.mrb[0].mxu0 %v317
        %v319 = vpop.f32.mrb[0].mxu0
        %v320 = vadd.f32 0.0, %v319
        %v321 = vpop.f32.mrb[0].mxu0
        %322 = vmatprep.mubr.f32.mxu0 0.0
        %v323 = vand.u32 %v224, 4294901760
        %v324 = vsub.f32 %v224, %v323
        %v325 = vand.u32 %v324, 4294901760
        %v326 = vsub.f32 %v324, %v325
        %v327 = vand.u32 %v326, 4294901760
        %328 = vmatmul.mubr.f32.gmra.mrb[0].mxu0 %v327
        %v329 = vpop.f32.mrb[0].mxu0
        %v330 = vadd.f32 0.0, %v329
        %v331 = vpop.f32.mrb[0].mxu0
        %332 = vdwg.mxu0
        %333 = vmatprep.subr.mxu0 0.0
        %v334 = vand.u32 %v211, 4294901760
        %v335 = vsub.f32 %v211, %v334
        %v336 = vand.u32 %v335, 4294901760
        %v337 = vsub.f32 %v335, %v336
        %v338 = vand.u32 %v337, 4294901760
        %339 = vmatpush1.msra.mxu0 %v338
        %340 = vmatprep.subr.mxu0 0.0
        %v341 = vand.u32 %v212, 4294901760
        %v342 = vsub.f32 %v212, %v341
        %v343 = vand.u32 %v342, 4294901760
        %v344 = vsub.f32 %v342, %v343
        %v345 = vand.u32 %v344, 4294901760
        %346 = vmatpush1.msra.mxu0 %v345
        %347 = vmatprep.subr.mxu0 0.0
        %348 = vmatpush1.msra.mxu0 0.0
        %349 = vmatprep.subr.mxu0 0.0
        %350 = vmatpush1.msra.mxu0 0.0
        %351 = vmatprep.subr.mxu0 0.0
        %352 = vmatpush1.msra.mxu0 0.0
        %353 = vmatprep.subr.mxu0 0.0
        %354 = vmatpush1.msra.mxu0 0.0
        %355 = vmatprep.subr.mxu0 0.0
        %356 = vmatpush1.msra.mxu0 0.0
        %357 = vmatprep.subr.mxu0 0.0
        %358 = vmatpush1.msra.mxu0 0.0
        %359 = vmatprep.subr.mxu0 0.0
        %360 = vmatpush1.msra.mxu0 0.0
        %361 = vmatprep.subr.mxu0 0.0
        %362 = vmatpush1.msra.mxu0 0.0
        %363 = vmatprep.subr.mxu0 0.0
        %364 = vmatpush1.msra.mxu0 0.0
        %365 = vmatprep.subr.mxu0 0.0
        %366 = vmatpush1.msra.mxu0 0.0
        %367 = vmatprep.subr.mxu0 0.0
        %368 = vmatpush1.msra.mxu0 0.0
        %369 = vmatprep.subr.mxu0 0.0
        %370 = vmatpush1.msra.mxu0 0.0
        %371 = vmatprep.subr.mxu0 0.0
        %372 = vmatpush1.msra.mxu0 0.0
        %373 = vmatprep.subr.mxu0 0.0
        %374 = vmatpush1.msra.mxu0 0.0
        %375 = vmatprep.subr.mxu0 0.0
        %376 = vmatpush1.msra.mxu0 0.0
        %377 = vmatprep.subr.mxu0 0.0
        %378 = vmatpush1.msra.mxu0 0.0
        %379 = vmatprep.subr.mxu0 0.0
        %380 = vmatpush1.msra.mxu0 0.0
        %381 = vmatprep.subr.mxu0 0.0
        %382 = vmatpush1.msra.mxu0 0.0
        %383 = vmatprep.subr.mxu0 0.0
        %384 = vmatpush1.msra.mxu0 0.0
        %385 = vmatprep.subr.mxu0 0.0
        %386 = vmatpush1.msra.mxu0 0.0
        %387 = vmatprep.subr.mxu0 0.0
        %388 = vmatpush1.msra.mxu0 0.0
        %389 = vmatprep.subr.mxu0 0.0
        %390 = vmatpush1.msra.mxu0 0.0
        %391 = vmatprep.subr.mxu0 0.0
        %392 = vmatpush1.msra.mxu0 0.0
        %393 = vmatprep.subr.mxu0 0.0
        %394 = vmatpush1.msra.mxu0 0.0
        %395 = vmatprep.subr.mxu0 0.0
        %396 = vmatpush1.msra.mxu0 0.0
        %397 = vmatprep.subr.mxu0 0.0
        %398 = vmatpush1.msra.mxu0 0.0
        %399 = vmatprep.subr.mxu0 0.0
        %400 = vmatpush1.msra.mxu0 0.0
        %401 = vmatprep.subr.mxu0 0.0
        %402 = vmatpush1.msra.mxu0 0.0
        %403 = vmatprep.subr.mxu0 0.0
        %404 = vmatpush1.msra.mxu0 0.0
        %405 = vmatprep.subr.mxu0 0.0
        %406 = vmatpush1.msra.mxu0 0.0
        %407 = vmatprep.mubr.f32.mxu0 0.0
        %v408 = vand.u32 %v215, 4294901760
        %409 = vmatmul.mubr.f32.gmra.mrb[0].mxu0 %v408
        %v410 = vpop.f32.mrb[0].mxu0
        %v411 = vadd.f32 %v300, %v410
        %v412 = vpop.f32.mrb[0].mxu0
        %413 = vmatprep.mubr.f32.mxu0 0.0
        %v414 = vand.u32 %v218, 4294901760
        %415 = vmatmul.mubr.f32.gmra.mrb[0].mxu0 %v414
        %v416 = vpop.f32.mrb[0].mxu0
        %v417 = vadd.f32 %v310, %v416
        %v418 = vpop.f32.mrb[0].mxu0
        %419 = vmatprep.mubr.f32.mxu0 0.0
        %v420 = vand.u32 %v221, 4294901760
        %421 = vmatmul.mubr.f32.gmra.mrb[0].mxu0 %v420
        %v422 = vpop.f32.mrb[0].mxu0
        %v423 = vadd.f32 %v320, %v422
        %v424 = vpop.f32.mrb[0].mxu0
        %425 = vmatprep.mubr.f32.mxu0 0.0
        %v426 = vand.u32 %v224, 4294901760
        %427 = vmatmul.mubr.f32.gmra.mrb[0].mxu0 %v426
        %v428 = vpop.f32.mrb[0].mxu0
        %v429 = vadd.f32 %v330, %v428
        %v430 = vpop.f32.mrb[0].mxu0
        %431 = vdwg.mxu0
        %432 = vmatprep.subr.mxu0 0.0
        %v433 = vand.u32 %v211, 4294901760
        %v434 = vsub.f32 %v211, %v433
        %435 = vmatpush1.msra.mxu0 %v434
        %436 = vmatprep.subr.mxu0 0.0
        %v437 = vand.u32 %v212, 4294901760
        %v438 = vsub.f32 %v212, %v437
        %439 = vmatpush1.msra.mxu0 %v438
        %440 = vmatprep.subr.mxu0 0.0
        %441 = vmatpush1.msra.mxu0 0.0
        %442 = vmatprep.subr.mxu0 0.0
        %443 = vmatpush1.msra.mxu0 0.0
        %444 = vmatprep.subr.mxu0 0.0
        %445 = vmatpush1.msra.mxu0 0.0
        %446 = vmatprep.subr.mxu0 0.0
        %447 = vmatpush1.msra.mxu0 0.0
        %448 = vmatprep.subr.mxu0 0.0
        %449 = vmatpush1.msra.mxu0 0.0
        %450 = vmatprep.subr.mxu0 0.0
        %451 = vmatpush1.msra.mxu0 0.0
        %452 = vmatprep.subr.mxu0 0.0
        %453 = vmatpush1.msra.mxu0 0.0
        %454 = vmatprep.subr.mxu0 0.0
        %455 = vmatpush1.msra.mxu0 0.0
        %456 = vmatprep.subr.mxu0 0.0
        %457 = vmatpush1.msra.mxu0 0.0
        %458 = vmatprep.subr.mxu0 0.0
        %459 = vmatpush1.msra.mxu0 0.0
        %460 = vmatprep.subr.mxu0 0.0
        %461 = vmatpush1.msra.mxu0 0.0
        %462 = vmatprep.subr.mxu0 0.0
        %463 = vmatpush1.msra.mxu0 0.0
        %464 = vmatprep.subr.mxu0 0.0
        %465 = vmatpush1.msra.mxu0 0.0
        %466 = vmatprep.subr.mxu0 0.0
        %467 = vmatpush1.msra.mxu0 0.0
        %468 = vmatprep.subr.mxu0 0.0
        %469 = vmatpush1.msra.mxu0 0.0
        %470 = vmatprep.subr.mxu0 0.0
        %471 = vmatpush1.msra.mxu0 0.0
        %472 = vmatprep.subr.mxu0 0.0
        %473 = vmatpush1.msra.mxu0 0.0
        %474 = vmatprep.subr.mxu0 0.0
        %475 = vmatpush1.msra.mxu0 0.0
        %476 = vmatprep.subr.mxu0 0.0
        %477 = vmatpush1.msra.mxu0 0.0
        %478 = vmatprep.subr.mxu0 0.0
        %479 = vmatpush1.msra.mxu0 0.0
        %480 = vmatprep.subr.mxu0 0.0
        %481 = vmatpush1.msra.mxu0 0.0
        %482 = vmatprep.subr.mxu0 0.0
        %483 = vmatpush1.msra.mxu0 0.0
        %484 = vmatprep.subr.mxu0 0.0
        %485 = vmatpush1.msra.mxu0 0.0
        %486 = vmatprep.subr.mxu0 0.0
        %487 = vmatpush1.msra.mxu0 0.0
        %488 = vmatprep.subr.mxu0 0.0
        %489 = vmatpush1.msra.mxu0 0.0
        %490 = vmatprep.subr.mxu0 0.0
        %491 = vmatpush1.msra.mxu0 0.0
        %492 = vmatprep.subr.mxu0 0.0
        %493 = vmatpush1.msra.mxu0 0.0
        %494 = vmatprep.subr.mxu0 0.0
        %495 = vmatpush1.msra.mxu0 0.0
        %496 = vmatprep.subr.mxu0 0.0
        %497 = vmatpush1.msra.mxu0 0.0
        %498 = vmatprep.subr.mxu0 0.0
        %499 = vmatpush1.msra.mxu0 0.0
        %500 = vmatprep.mubr.f32.mxu0 0.0
        %v501 = vand.u32 %v215, 4294901760
        %v502 = vsub.f32 %v215, %v501
        %503 = vmatmul.mubr.f32.gmra.mrb[0].mxu0 %v502
        %v504 = vpop.f32.mrb[0].mxu0
        %v505 = vadd.f32 %v411, %v504
        %v506 = vpop.f32.mrb[0].mxu0
        %507 = vmatprep.mubr.f32.mxu0 0.0
        %v508 = vand.u32 %v218, 4294901760
        %v509 = vsub.f32 %v218, %v508
        %510 = vmatmul.mubr.f32.gmra.mrb[0].mxu0 %v509
        %v511 = vpop.f32.mrb[0].mxu0
        %v512 = vadd.f32 %v417, %v511
        %v513 = vpop.f32.mrb[0].mxu0
        %514 = vmatprep.mubr.f32.mxu0 0.0
        %v515 = vand.u32 %v221, 4294901760
        %v516 = vsub.f32 %v221, %v515
        %517 = vmatmul.mubr.f32.gmra.mrb[0].mxu0 %v516
        %v518 = vpop.f32.mrb[0].mxu0
        %v519 = vadd.f32 %v423, %v518
        %v520 = vpop.f32.mrb[0].mxu0
        %521 = vmatprep.mubr.f32.mxu0 0.0
        %v522 = vand.u32 %v224, 4294901760
        %v523 = vsub.f32 %v224, %v522
        %524 = vmatmul.mubr.f32.gmra.mrb[0].mxu0 %v523
        %v525 = vpop.f32.mrb[0].mxu0
        %v526 = vadd.f32 %v429, %v525
        %v527 = vpop.f32.mrb[0].mxu0
        %528 = vdwg.mxu0
        %529 = vmatprep.subr.mxu0 0.0
        %v530 = vand.u32 %v211, 4294901760
        %531 = vmatpush1.msra.mxu0 %v530
        %532 = vmatprep.subr.mxu0 0.0
        %v533 = vand.u32 %v212, 4294901760
        %534 = vmatpush1.msra.mxu0 %v533
        %535 = vmatprep.subr.mxu0 0.0
        %536 = vmatpush1.msra.mxu0 0.0
        %537 = vmatprep.subr.mxu0 0.0
        %538 = vmatpush1.msra.mxu0 0.0
        %539 = vmatprep.subr.mxu0 0.0
        %540 = vmatpush1.msra.mxu0 0.0
        %541 = vmatprep.subr.mxu0 0.0
        %542 = vmatpush1.msra.mxu0 0.0
        %543 = vmatprep.subr.mxu0 0.0
        %544 = vmatpush1.msra.mxu0 0.0
        %545 = vmatprep.subr.mxu0 0.0
        %546 = vmatpush1.msra.mxu0 0.0
        %547 = vmatprep.subr.mxu0 0.0
        %548 = vmatpush1.msra.mxu0 0.0
        %549 = vmatprep.subr.mxu0 0.0
        %550 = vmatpush1.msra.mxu0 0.0
        %551 = vmatprep.subr.mxu0 0.0
        %552 = vmatpush1.msra.mxu0 0.0
        %553 = vmatprep.subr.mxu0 0.0
        %554 = vmatpush1.msra.mxu0 0.0
        %555 = vmatprep.subr.mxu0 0.0
        %556 = vmatpush1.msra.mxu0 0.0
        %557 = vmatprep.subr.mxu0 0.0
        %558 = vmatpush1.msra.mxu0 0.0
        %559 = vmatprep.subr.mxu0 0.0
        %560 = vmatpush1.msra.mxu0 0.0
        %561 = vmatprep.subr.mxu0 0.0
        %562 = vmatpush1.msra.mxu0 0.0
        %563 = vmatprep.subr.mxu0 0.0
        %564 = vmatpush1.msra.mxu0 0.0
        %565 = vmatprep.subr.mxu0 0.0
        %566 = vmatpush1.msra.mxu0 0.0
        %567 = vmatprep.subr.mxu0 0.0
        %568 = vmatpush1.msra.mxu0 0.0
        %569 = vmatprep.subr.mxu0 0.0
        %570 = vmatpush1.msra.mxu0 0.0
        %571 = vmatprep.subr.mxu0 0.0
        %572 = vmatpush1.msra.mxu0 0.0
        %573 = vmatprep.subr.mxu0 0.0
        %574 = vmatpush1.msra.mxu0 0.0
        %575 = vmatprep.subr.mxu0 0.0
        %576 = vmatpush1.msra.mxu0 0.0
        %577 = vmatprep.subr.mxu0 0.0
        %578 = vmatpush1.msra.mxu0 0.0
        %579 = vmatprep.subr.mxu0 0.0
        %580 = vmatpush1.msra.mxu0 0.0
        %581 = vmatprep.subr.mxu0 0.0
        %582 = vmatpush1.msra.mxu0 0.0
        %583 = vmatprep.subr.mxu0 0.0
        %584 = vmatpush1.msra.mxu0 0.0
        %585 = vmatprep.subr.mxu0 0.0
        %586 = vmatpush1.msra.mxu0 0.0
        %587 = vmatprep.subr.mxu0 0.0
        %588 = vmatpush1.msra.mxu0 0.0
        %589 = vmatprep.subr.mxu0 0.0
        %590 = vmatpush1.msra.mxu0 0.0
        %591 = vmatprep.subr.mxu0 0.0
        %592 = vmatpush1.msra.mxu0 0.0
        %593 = vmatprep.subr.mxu0 0.0
        %594 = vmatpush1.msra.mxu0 0.0
        %595 = vmatprep.mubr.f32.mxu0 0.0
        %v596 = vand.u32 %v215, 4294901760
        %v597 = vsub.f32 %v215, %v596
        %v598 = vand.u32 %v597, 4294901760
        %599 = vmatmul.mubr.f32.gmra.mrb[0].mxu0 %v598
        %v600 = vpop.f32.mrb[0].mxu0
        %v601 = vadd.f32 %v505, %v600
        %v602 = vpop.f32.mrb[0].mxu0
        %603 = vmatprep.mubr.f32.mxu0 0.0
        %v604 = vand.u32 %v218, 4294901760
        %v605 = vsub.f32 %v218, %v604
        %v606 = vand.u32 %v605, 4294901760
        %607 = vmatmul.mubr.f32.gmra.mrb[0].mxu0 %v606
        %v608 = vpop.f32.mrb[0].mxu0
        %v609 = vadd.f32 %v512, %v608
        %v610 = vpop.f32.mrb[0].mxu0
        %611 = vmatprep.mubr.f32.mxu0 0.0
        %v612 = vand.u32 %v221, 4294901760
        %v613 = vsub.f32 %v221, %v612
        %v614 = vand.u32 %v613, 4294901760
        %615 = vmatmul.mubr.f32.gmra.mrb[0].mxu0 %v614
        %v616 = vpop.f32.mrb[0].mxu0
        %v617 = vadd.f32 %v519, %v616
        %v618 = vpop.f32.mrb[0].mxu0
        %619 = vmatprep.mubr.f32.mxu0 0.0
        %v620 = vand.u32 %v224, 4294901760
        %v621 = vsub.f32 %v224, %v620
        %v622 = vand.u32 %v621, 4294901760
        %623 = vmatmul.mubr.f32.gmra.mrb[0].mxu0 %v622
        %v624 = vpop.f32.mrb[0].mxu0
        %v625 = vadd.f32 %v526, %v624
        %v626 = vpop.f32.mrb[0].mxu0
        %627 = vdwg.mxu0
        %628 = vmatprep.subr.mxu0 0.0
        %v629 = vand.u32 %v211, 4294901760
        %v630 = vsub.f32 %v211, %v629
        %v631 = vand.u32 %v630, 4294901760
        %632 = vmatpush1.msra.mxu0 %v631
        %633 = vmatprep.subr.mxu0 0.0
        %v634 = vand.u32 %v212, 4294901760
        %v635 = vsub.f32 %v212, %v634
        %v636 = vand.u32 %v635, 4294901760
        %637 = vmatpush1.msra.mxu0 %v636
        %638 = vmatprep.subr.mxu0 0.0
        %639 = vmatpush1.msra.mxu0 0.0
        %640 = vmatprep.subr.mxu0 0.0
        %641 = vmatpush1.msra.mxu0 0.0
        %642 = vmatprep.subr.mxu0 0.0
        %643 = vmatpush1.msra.mxu0 0.0
        %644 = vmatprep.subr.mxu0 0.0
        %645 = vmatpush1.msra.mxu0 0.0
        %646 = vmatprep.subr.mxu0 0.0
        %647 = vmatpush1.msra.mxu0 0.0
        %648 = vmatprep.subr.mxu0 0.0
        %649 = vmatpush1.msra.mxu0 0.0
        %650 = vmatprep.subr.mxu0 0.0
        %651 = vmatpush1.msra.mxu0 0.0
        %652 = vmatprep.subr.mxu0 0.0
        %653 = vmatpush1.msra.mxu0 0.0
        %654 = vmatprep.subr.mxu0 0.0
        %655 = vmatpush1.msra.mxu0 0.0
        %656 = vmatprep.subr.mxu0 0.0
        %657 = vmatpush1.msra.mxu0 0.0
        %658 = vmatprep.subr.mxu0 0.0
        %659 = vmatpush1.msra.mxu0 0.0
        %660 = vmatprep.subr.mxu0 0.0
        %661 = vmatpush1.msra.mxu0 0.0
        %662 = vmatprep.subr.mxu0 0.0
        %663 = vmatpush1.msra.mxu0 0.0
        %664 = vmatprep.subr.mxu0 0.0
        %665 = vmatpush1.msra.mxu0 0.0
        %666 = vmatprep.subr.mxu0 0.0
        %667 = vmatpush1.msra.mxu0 0.0
        %668 = vmatprep.subr.mxu0 0.0
        %669 = vmatpush1.msra.mxu0 0.0
        %670 = vmatprep.subr.mxu0 0.0
        %671 = vmatpush1.msra.mxu0 0.0
        %672 = vmatprep.subr.mxu0 0.0
        %673 = vmatpush1.msra.mxu0 0.0
        %674 = vmatprep.subr.mxu0 0.0
        %675 = vmatpush1.msra.mxu0 0.0
        %676 = vmatprep.subr.mxu0 0.0
        %677 = vmatpush1.msra.mxu0 0.0
        %678 = vmatprep.subr.mxu0 0.0
        %679 = vmatpush1.msra.mxu0 0.0
        %680 = vmatprep.subr.mxu0 0.0
        %681 = vmatpush1.msra.mxu0 0.0
        %682 = vmatprep.subr.mxu0 0.0
        %683 = vmatpush1.msra.mxu0 0.0
        %684 = vmatprep.subr.mxu0 0.0
        %685 = vmatpush1.msra.mxu0 0.0
        %686 = vmatprep.subr.mxu0 0.0
        %687 = vmatpush1.msra.mxu0 0.0
        %688 = vmatprep.subr.mxu0 0.0
        %689 = vmatpush1.msra.mxu0 0.0
        %690 = vmatprep.subr.mxu0 0.0
        %691 = vmatpush1.msra.mxu0 0.0
        %692 = vmatprep.subr.mxu0 0.0
        %693 = vmatpush1.msra.mxu0 0.0
        %694 = vmatprep.subr.mxu0 0.0
        %695 = vmatpush1.msra.mxu0 0.0
        %696 = vmatprep.subr.mxu0 0.0
        %697 = vmatpush1.msra.mxu0 0.0
        %698 = vmatprep.mubr.f32.mxu0 0.0
        %v699 = vand.u32 %v215, 4294901760
        %700 = vmatmul.mubr.f32.gmra.mrb[0].mxu0 %v699
        %v701 = vpop.f32.mrb[0].mxu0
        %v702 = vadd.f32 %v601, %v701
        %v703 = vpop.f32.mrb[0].mxu0
        %704 = vmatprep.mubr.f32.mxu0 0.0
        %v705 = vand.u32 %v218, 4294901760
        %706 = vmatmul.mubr.f32.gmra.mrb[0].mxu0 %v705
        %v707 = vpop.f32.mrb[0].mxu0
        %v708 = vadd.f32 %v609, %v707
        %v709 = vpop.f32.mrb[0].mxu0
        %710 = vmatprep.mubr.f32.mxu0 0.0
        %v711 = vand.u32 %v221, 4294901760
        %712 = vmatmul.mubr.f32.gmra.mrb[0].mxu0 %v711
        %v713 = vpop.f32.mrb[0].mxu0
        %v714 = vadd.f32 %v617, %v713
        %v715 = vpop.f32.mrb[0].mxu0
        %716 = vmatprep.mubr.f32.mxu0 0.0
        %v717 = vand.u32 %v224, 4294901760
        %718 = vmatmul.mubr.f32.gmra.mrb[0].mxu0 %v717
        %v719 = vpop.f32.mrb[0].mxu0
        %v720 = vadd.f32 %v625, %v719
        %v721 = vpop.f32.mrb[0].mxu0
        %722 = vdwg.mxu0
        %723 = vmatprep.subr.mxu0 0.0
        %v724 = vand.u32 %v211, 4294901760
        %725 = vmatpush1.msra.mxu0 %v724
        %726 = vmatprep.subr.mxu0 0.0
        %v727 = vand.u32 %v212, 4294901760
        %728 = vmatpush1.msra.mxu0 %v727
        %729 = vmatprep.subr.mxu0 0.0
        %730 = vmatpush1.msra.mxu0 0.0
        %731 = vmatprep.subr.mxu0 0.0
        %732 = vmatpush1.msra.mxu0 0.0
        %733 = vmatprep.subr.mxu0 0.0
        %734 = vmatpush1.msra.mxu0 0.0
        %735 = vmatprep.subr.mxu0 0.0
        %736 = vmatpush1.msra.mxu0 0.0
        %737 = vmatprep.subr.mxu0 0.0
        %738 = vmatpush1.msra.mxu0 0.0
        %739 = vmatprep.subr.mxu0 0.0
        %740 = vmatpush1.msra.mxu0 0.0
        %741 = vmatprep.subr.mxu0 0.0
        %742 = vmatpush1.msra.mxu0 0.0
        %743 = vmatprep.subr.mxu0 0.0
        %744 = vmatpush1.msra.mxu0 0.0
        %745 = vmatprep.subr.mxu0 0.0
        %746 = vmatpush1.msra.mxu0 0.0
        %747 = vmatprep.subr.mxu0 0.0
        %748 = vmatpush1.msra.mxu0 0.0
        %749 = vmatprep.subr.mxu0 0.0
        %750 = vmatpush1.msra.mxu0 0.0
        %751 = vmatprep.subr.mxu0 0.0
        %752 = vmatpush1.msra.mxu0 0.0
        %753 = vmatprep.subr.mxu0 0.0
        %754 = vmatpush1.msra.mxu0 0.0
        %755 = vmatprep.subr.mxu0 0.0
        %756 = vmatpush1.msra.mxu0 0.0
        %757 = vmatprep.subr.mxu0 0.0
        %758 = vmatpush1.msra.mxu0 0.0
        %759 = vmatprep.subr.mxu0 0.0
        %760 = vmatpush1.msra.mxu0 0.0
        %761 = vmatprep.subr.mxu0 0.0
        %762 = vmatpush1.msra.mxu0 0.0
        %763 = vmatprep.subr.mxu0 0.0
        %764 = vmatpush1.msra.mxu0 0.0
        %765 = vmatprep.subr.mxu0 0.0
        %766 = vmatpush1.msra.mxu0 0.0
        %767 = vmatprep.subr.mxu0 0.0
        %768 = vmatpush1.msra.mxu0 0.0
        %769 = vmatprep.subr.mxu0 0.0
        %770 = vmatpush1.msra.mxu0 0.0
        %771 = vmatprep.subr.mxu0 0.0
        %772 = vmatpush1.msra.mxu0 0.0
        %773 = vmatprep.subr.mxu0 0.0
        %774 = vmatpush1.msra.mxu0 0.0
        %775 = vmatprep.subr.mxu0 0.0
        %776 = vmatpush1.msra.mxu0 0.0
        %777 = vmatprep.subr.mxu0 0.0
        %778 = vmatpush1.msra.mxu0 0.0
        %779 = vmatprep.subr.mxu0 0.0
        %780 = vmatpush1.msra.mxu0 0.0
        %781 = vmatprep.subr.mxu0 0.0
        %782 = vmatpush1.msra.mxu0 0.0
        %783 = vmatprep.subr.mxu0 0.0
        %784 = vmatpush1.msra.mxu0 0.0
        %785 = vmatprep.subr.mxu0 0.0
        %786 = vmatpush1.msra.mxu0 0.0
        %787 = vmatprep.subr.mxu0 0.0
        %788 = vmatpush1.msra.mxu0 0.0
        %789 = vmatprep.mubr.f32.mxu0 0.0
        %v790 = vand.u32 %v215, 4294901760
        %791 = vmatmul.mubr.f32.gmra.mrb[0].mxu0 %v790
        %v792 = vpop.f32.mrb[0].mxu0
        %v793 = vadd.f32 %v702, %v792
        %v794 = vpop.f32.mrb[0].mxu0
        %795 = vmatprep.mubr.f32.mxu0 0.0
        %v796 = vand.u32 %v218, 4294901760
        %797 = vmatmul.mubr.f32.gmra.mrb[0].mxu0 %v796
        %v798 = vpop.f32.mrb[0].mxu0
        %v799 = vadd.f32 %v708, %v798
        %v800 = vpop.f32.mrb[0].mxu0
        %801 = vmatprep.mubr.f32.mxu0 0.0
        %v802 = vand.u32 %v221, 4294901760
        %803 = vmatmul.mubr.f32.gmra.mrb[0].mxu0 %v802
        %v804 = vpop.f32.mrb[0].mxu0
        %v805 = vadd.f32 %v714, %v804
        %v806 = vpop.f32.mrb[0].mxu0
        %807 = vmatprep.mubr.f32.mxu0 0.0
        %v808 = vand.u32 %v224, 4294901760
        %809 = vmatmul.mubr.f32.gmra.mrb[0].mxu0 %v808
        %v810 = vpop.f32.mrb[0].mxu0
        %v811 = vadd.f32 %v720, %v810
        %v812 = vpop.f32.mrb[0].mxu0
        %813 = vdwg.mxu0
        %814 = vrot.lane.b32.xlu0 %v207, 112
        %v815 = vpop.permute.xlu0 %814
        %816 = vrot.lane.b32.xlu0 %v208, 112
        %v817 = vpop.permute.xlu0 %816
        %818 = vrot.lane.b32.xlu0 %v209, 112
        %v819 = vpop.permute.xlu0 %818
        %820 = vrot.lane.b32.xlu0 %v210, 112
        %v821 = vpop.permute.xlu0 %820
        %v822 = vsel %vm213, %v815, 0
        %v824 = vsel %vm213, %v817, 0
        %v826 = vsel %vm213, %v819, 0
        %v828 = vsel %vm213, %v821, 0
        %830 = vmatprep.subr.mxu0 0.0
        %v831 = vand.u32 %v211, 4294901760
        %832 = vmatpush1.msra.mxu0 %v831
        %833 = vmatprep.subr.mxu0 0.0
        %v834 = vand.u32 %v212, 4294901760
        %835 = vmatpush1.msra.mxu0 %v834
        %836 = vmatprep.subr.mxu0 0.0
        %837 = vmatpush1.msra.mxu0 0.0
        %838 = vmatprep.subr.mxu0 0.0
        %839 = vmatpush1.msra.mxu0 0.0
        %840 = vmatprep.subr.mxu0 0.0
        %841 = vmatpush1.msra.mxu0 0.0
        %842 = vmatprep.subr.mxu0 0.0
        %843 = vmatpush1.msra.mxu0 0.0
        %844 = vmatprep.subr.mxu0 0.0
        %845 = vmatpush1.msra.mxu0 0.0
        %846 = vmatprep.subr.mxu0 0.0
        %847 = vmatpush1.msra.mxu0 0.0
        %848 = vmatprep.subr.mxu0 0.0
        %849 = vmatpush1.msra.mxu0 0.0
        %850 = vmatprep.subr.mxu0 0.0
        %851 = vmatpush1.msra.mxu0 0.0
        %852 = vmatprep.subr.mxu0 0.0
        %853 = vmatpush1.msra.mxu0 0.0
        %854 = vmatprep.subr.mxu0 0.0
        %855 = vmatpush1.msra.mxu0 0.0
        %856 = vmatprep.subr.mxu0 0.0
        %857 = vmatpush1.msra.mxu0 0.0
        %858 = vmatprep.subr.mxu0 0.0
        %859 = vmatpush1.msra.mxu0 0.0
        %860 = vmatprep.subr.mxu0 0.0
        %861 = vmatpush1.msra.mxu0 0.0
        %862 = vmatprep.subr.mxu0 0.0
        %863 = vmatpush1.msra.mxu0 0.0
        %864 = vmatprep.subr.mxu0 0.0
        %865 = vmatpush1.msra.mxu0 0.0
        %866 = vmatprep.subr.mxu0 0.0
        %867 = vmatpush1.msra.mxu0 0.0
        %868 = vmatprep.subr.mxu0 0.0
        %869 = vmatpush1.msra.mxu0 0.0
        %870 = vmatprep.subr.mxu0 0.0
        %871 = vmatpush1.msra.mxu0 0.0
        %872 = vmatprep.subr.mxu0 0.0
        %873 = vmatpush1.msra.mxu0 0.0
        %874 = vmatprep.subr.mxu0 0.0
        %875 = vmatpush1.msra.mxu0 0.0
        %876 = vmatprep.subr.mxu0 0.0
        %877 = vmatpush1.msra.mxu0 0.0
        %878 = vmatprep.subr.mxu0 0.0
        %879 = vmatpush1.msra.mxu0 0.0
        %880 = vmatprep.subr.mxu0 0.0
        %881 = vmatpush1.msra.mxu0 0.0
        %882 = vmatprep.subr.mxu0 0.0
        %883 = vmatpush1.msra.mxu0 0.0
        %884 = vmatprep.subr.mxu0 0.0
        %885 = vmatpush1.msra.mxu0 0.0
        %886 = vmatprep.subr.mxu0 0.0
        %887 = vmatpush1.msra.mxu0 0.0
        %888 = vmatprep.subr.mxu0 0.0
        %889 = vmatpush1.msra.mxu0 0.0
        %890 = vmatprep.subr.mxu0 0.0
        %891 = vmatpush1.msra.mxu0 0.0
        %892 = vmatprep.subr.mxu0 0.0
        %893 = vmatpush1.msra.mxu0 0.0
        %894 = vmatprep.subr.mxu0 0.0
        %895 = vmatpush1.msra.mxu0 0.0
        %896 = vmatprep.mubr.f32.mxu0 0.0
        %v897 = vand.u32 %v822, 4294901760
        %v898 = vsub.f32 %v822, %v897
        %v899 = vand.u32 %v898, 4294901760
        %v900 = vsub.f32 %v898, %v899
        %v901 = vand.u32 %v900, 4294901760
        %902 = vmatmul.mubr.f32.gmra.mrb[0].mxu0 %v901
        %v903 = vpop.f32.mrb[0].mxu0
        %v904 = vadd.f32 0.0, %v903
        %v905 = vpop.f32.mrb[0].mxu0
        %906 = vmatprep.mubr.f32.mxu0 0.0
        %v907 = vand.u32 %v824, 4294901760
        %v908 = vsub.f32 %v824, %v907
        %v909 = vand.u32 %v908, 4294901760
        %v910 = vsub.f32 %v908, %v909
        %v911 = vand.u32 %v910, 4294901760
        %912 = vmatmul.mubr.f32.gmra.mrb[0].mxu0 %v911
        %v913 = vpop.f32.mrb[0].mxu0
        %v914 = vadd.f32 0.0, %v913
        %v915 = vpop.f32.mrb[0].mxu0
        %916 = vmatprep.mubr.f32.mxu0 0.0
        %v917 = vand.u32 %v826, 4294901760
        %v918 = vsub.f32 %v826, %v917
        %v919 = vand.u32 %v918, 4294901760
        %v920 = vsub.f32 %v918, %v919
        %v921 = vand.u32 %v920, 4294901760
        %922 = vmatmul.mubr.f32.gmra.mrb[0].mxu0 %v921
        %v923 = vpop.f32.mrb[0].mxu0
        %v924 = vadd.f32 0.0, %v923
        %v925 = vpop.f32.mrb[0].mxu0
        %926 = vmatprep.mubr.f32.mxu0 0.0
        %v927 = vand.u32 %v828, 4294901760
        %v928 = vsub.f32 %v828, %v927
        %v929 = vand.u32 %v928, 4294901760
        %v930 = vsub.f32 %v928, %v929
        %v931 = vand.u32 %v930, 4294901760
        %932 = vmatmul.mubr.f32.gmra.mrb[0].mxu0 %v931
        %v933 = vpop.f32.mrb[0].mxu0
        %v934 = vadd.f32 0.0, %v933
        %v935 = vpop.f32.mrb[0].mxu0
        %936 = vdwg.mxu0
        %937 = vmatprep.subr.mxu0 0.0
        %v938 = vand.u32 %v211, 4294901760
        %v939 = vsub.f32 %v211, %v938
        %v940 = vand.u32 %v939, 4294901760
        %v941 = vsub.f32 %v939, %v940
        %v942 = vand.u32 %v941, 4294901760
        %943 = vmatpush1.msra.mxu0 %v942
        %944 = vmatprep.subr.mxu0 0.0
        %v945 = vand.u32 %v212, 4294901760
        %v946 = vsub.f32 %v212, %v945
        %v947 = vand.u32 %v946, 4294901760
        %v948 = vsub.f32 %v946, %v947
        %v949 = vand.u32 %v948, 4294901760
        %950 = vmatpush1.msra.mxu0 %v949
        %951 = vmatprep.subr.mxu0 0.0
        %952 = vmatpush1.msra.mxu0 0.0
        %953 = vmatprep.subr.mxu0 0.0
        %954 = vmatpush1.msra.mxu0 0.0
        %955 = vmatprep.subr.mxu0 0.0
        %956 = vmatpush1.msra.mxu0 0.0
        %957 = vmatprep.subr.mxu0 0.0
        %958 = vmatpush1.msra.mxu0 0.0
        %959 = vmatprep.subr.mxu0 0.0
        %960 = vmatpush1.msra.mxu0 0.0
        %961 = vmatprep.subr.mxu0 0.0
        %962 = vmatpush1.msra.mxu0 0.0
        %963 = vmatprep.subr.mxu0 0.0
        %964 = vmatpush1.msra.mxu0 0.0
        %965 = vmatprep.subr.mxu0 0.0
        %966 = vmatpush1.msra.mxu0 0.0
        %967 = vmatprep.subr.mxu0 0.0
        %968 = vmatpush1.msra.mxu0 0.0
        %969 = vmatprep.subr.mxu0 0.0
        %970 = vmatpush1.msra.mxu0 0.0
        %971 = vmatprep.subr.mxu0 0.0
        %972 = vmatpush1.msra.mxu0 0.0
        %973 = vmatprep.subr.mxu0 0.0
        %974 = vmatpush1.msra.mxu0 0.0
        %975 = vmatprep.subr.mxu0 0.0
        %976 = vmatpush1.msra.mxu0 0.0
        %977 = vmatprep.subr.mxu0 0.0
        %978 = vmatpush1.msra.mxu0 0.0
        %979 = vmatprep.subr.mxu0 0.0
        %980 = vmatpush1.msra.mxu0 0.0
        %981 = vmatprep.subr.mxu0 0.0
        %982 = vmatpush1.msra.mxu0 0.0
        %983 = vmatprep.subr.mxu0 0.0
        %984 = vmatpush1.msra.mxu0 0.0
        %985 = vmatprep.subr.mxu0 0.0
        %986 = vmatpush1.msra.mxu0 0.0
        %987 = vmatprep.subr.mxu0 0.0
        %988 = vmatpush1.msra.mxu0 0.0
        %989 = vmatprep.subr.mxu0 0.0
        %990 = vmatpush1.msra.mxu0 0.0
        %991 = vmatprep.subr.mxu0 0.0
        %992 = vmatpush1.msra.mxu0 0.0
        %993 = vmatprep.subr.mxu0 0.0
        %994 = vmatpush1.msra.mxu0 0.0
        %995 = vmatprep.subr.mxu0 0.0
        %996 = vmatpush1.msra.mxu0 0.0
        %997 = vmatprep.subr.mxu0 0.0
        %998 = vmatpush1.msra.mxu0 0.0
        %999 = vmatprep.subr.mxu0 0.0
        %1000 = vmatpush1.msra.mxu0 0.0
        %1001 = vmatprep.subr.mxu0 0.0
        %1002 = vmatpush1.msra.mxu0 0.0
        %1003 = vmatprep.subr.mxu0 0.0
        %1004 = vmatpush1.msra.mxu0 0.0
        %1005 = vmatprep.subr.mxu0 0.0
        %1006 = vmatpush1.msra.mxu0 0.0
        %1007 = vmatprep.subr.mxu0 0.0
        %1008 = vmatpush1.msra.mxu0 0.0
        %1009 = vmatprep.subr.mxu0 0.0
        %1010 = vmatpush1.msra.mxu0 0.0
        %1011 = vmatprep.mubr.f32.mxu0 0.0
        %v1012 = vand.u32 %v822, 4294901760
        %1013 = vmatmul.mubr.f32.gmra.mrb[0].mxu0 %v1012
        %v1014 = vpop.f32.mrb[0].mxu0
        %v1015 = vadd.f32 %v904, %v1014
        %v1016 = vpop.f32.mrb[0].mxu0
        %1017 = vmatprep.mubr.f32.mxu0 0.0
        %v1018 = vand.u32 %v824, 4294901760
        %1019 = vmatmul.mubr.f32.gmra.mrb[0].mxu0 %v1018
        %v1020 = vpop.f32.mrb[0].mxu0
        %v1021 = vadd.f32 %v914, %v1020
        %v1022 = vpop.f32.mrb[0].mxu0
        %1023 = vmatprep.mubr.f32.mxu0 0.0
        %v1024 = vand.u32 %v826, 4294901760
        %1025 = vmatmul.mubr.f32.gmra.mrb[0].mxu0 %v1024
        %v1026 = vpop.f32.mrb[0].mxu0
        %v1027 = vadd.f32 %v924, %v1026
        %v1028 = vpop.f32.mrb[0].mxu0
        %1029 = vmatprep.mubr.f32.mxu0 0.0
        %v1030 = vand.u32 %v828, 4294901760
        %1031 = vmatmul.mubr.f32.gmra.mrb[0].mxu0 %v1030
        %v1032 = vpop.f32.mrb[0].mxu0
        %v1033 = vadd.f32 %v934, %v1032
        %v1034 = vpop.f32.mrb[0].mxu0
        %1035 = vdwg.mxu0
        %1036 = vmatprep.subr.mxu0 0.0
        %v1037 = vand.u32 %v211, 4294901760
        %v1038 = vsub.f32 %v211, %v1037
        %1039 = vmatpush1.msra.mxu0 %v1038
        %1040 = vmatprep.subr.mxu0 0.0
        %v1041 = vand.u32 %v212, 4294901760
        %v1042 = vsub.f32 %v212, %v1041
        %1043 = vmatpush1.msra.mxu0 %v1042
        %1044 = vmatprep.subr.mxu0 0.0
        %1045 = vmatpush1.msra.mxu0 0.0
        %1046 = vmatprep.subr.mxu0 0.0
        %1047 = vmatpush1.msra.mxu0 0.0
        %1048 = vmatprep.subr.mxu0 0.0
        %1049 = vmatpush1.msra.mxu0 0.0
        %1050 = vmatprep.subr.mxu0 0.0
        %1051 = vmatpush1.msra.mxu0 0.0
        %1052 = vmatprep.subr.mxu0 0.0
        %1053 = vmatpush1.msra.mxu0 0.0
        %1054 = vmatprep.subr.mxu0 0.0
        %1055 = vmatpush1.msra.mxu0 0.0
        %1056 = vmatprep.subr.mxu0 0.0
        %1057 = vmatpush1.msra.mxu0 0.0
        %1058 = vmatprep.subr.mxu0 0.0
        %1059 = vmatpush1.msra.mxu0 0.0
        %1060 = vmatprep.subr.mxu0 0.0
        %1061 = vmatpush1.msra.mxu0 0.0
        %1062 = vmatprep.subr.mxu0 0.0
        %1063 = vmatpush1.msra.mxu0 0.0
        %1064 = vmatprep.subr.mxu0 0.0
        %1065 = vmatpush1.msra.mxu0 0.0
        %1066 = vmatprep.subr.mxu0 0.0
        %1067 = vmatpush1.msra.mxu0 0.0
        %1068 = vmatprep.subr.mxu0 0.0
        %1069 = vmatpush1.msra.mxu0 0.0
        %1070 = vmatprep.subr.mxu0 0.0
        %1071 = vmatpush1.msra.mxu0 0.0
        %1072 = vmatprep.subr.mxu0 0.0
        %1073 = vmatpush1.msra.mxu0 0.0
        %1074 = vmatprep.subr.mxu0 0.0
        %1075 = vmatpush1.msra.mxu0 0.0
        %1076 = vmatprep.subr.mxu0 0.0
        %1077 = vmatpush1.msra.mxu0 0.0
        %1078 = vmatprep.subr.mxu0 0.0
        %1079 = vmatpush1.msra.mxu0 0.0
        %1080 = vmatprep.subr.mxu0 0.0
        %1081 = vmatpush1.msra.mxu0 0.0
        %1082 = vmatprep.subr.mxu0 0.0
        %1083 = vmatpush1.msra.mxu0 0.0
        %1084 = vmatprep.subr.mxu0 0.0
        %1085 = vmatpush1.msra.mxu0 0.0
        %1086 = vmatprep.subr.mxu0 0.0
        %1087 = vmatpush1.msra.mxu0 0.0
        %1088 = vmatprep.subr.mxu0 0.0
        %1089 = vmatpush1.msra.mxu0 0.0
        %1090 = vmatprep.subr.mxu0 0.0
        %1091 = vmatpush1.msra.mxu0 0.0
        %1092 = vmatprep.subr.mxu0 0.0
        %1093 = vmatpush1.msra.mxu0 0.0
        %1094 = vmatprep.subr.mxu0 0.0
        %1095 = vmatpush1.msra.mxu0 0.0
        %1096 = vmatprep.subr.mxu0 0.0
        %1097 = vmatpush1.msra.mxu0 0.0
        %1098 = vmatprep.subr.mxu0 0.0
        %1099 = vmatpush1.msra.mxu0 0.0
        %1100 = vmatprep.subr.mxu0 0.0
        %1101 = vmatpush1.msra.mxu0 0.0
        %1102 = vmatprep.subr.mxu0 0.0
        %1103 = vmatpush1.msra.mxu0 0.0
        %1104 = vmatprep.mubr.f32.mxu0 0.0
        %v1105 = vand.u32 %v822, 4294901760
        %v1106 = vsub.f32 %v822, %v1105
        %1107 = vmatmul.mubr.f32.gmra.mrb[0].mxu0 %v1106
        %v1108 = vpop.f32.mrb[0].mxu0
        %v1109 = vadd.f32 %v1015, %v1108
        %v1110 = vpop.f32.mrb[0].mxu0
        %1111 = vmatprep.mubr.f32.mxu0 0.0
        %v1112 = vand.u32 %v824, 4294901760
        %v1113 = vsub.f32 %v824, %v1112
        %1114 = vmatmul.mubr.f32.gmra.mrb[0].mxu0 %v1113
        %v1115 = vpop.f32.mrb[0].mxu0
        %v1116 = vadd.f32 %v1021, %v1115
        %v1117 = vpop.f32.mrb[0].mxu0
        %1118 = vmatprep.mubr.f32.mxu0 0.0
        %v1119 = vand.u32 %v826, 4294901760
        %v1120 = vsub.f32 %v826, %v1119
        %1121 = vmatmul.mubr.f32.gmra.mrb[0].mxu0 %v1120
        %v1122 = vpop.f32.mrb[0].mxu0
        %v1123 = vadd.f32 %v1027, %v1122
        %v1124 = vpop.f32.mrb[0].mxu0
        %1125 = vmatprep.mubr.f32.mxu0 0.0
        %v1126 = vand.u32 %v828, 4294901760
        %v1127 = vsub.f32 %v828, %v1126
        %1128 = vmatmul.mubr.f32.gmra.mrb[0].mxu0 %v1127
        %v1129 = vpop.f32.mrb[0].mxu0
        %v1130 = vadd.f32 %v1033, %v1129
        %v1131 = vpop.f32.mrb[0].mxu0
        %1132 = vdwg.mxu0
        %1133 = vmatprep.subr.mxu0 0.0
        %v1134 = vand.u32 %v211, 4294901760
        %1135 = vmatpush1.msra.mxu0 %v1134
        %1136 = vmatprep.subr.mxu0 0.0
        %v1137 = vand.u32 %v212, 4294901760
        %1138 = vmatpush1.msra.mxu0 %v1137
        %1139 = vmatprep.subr.mxu0 0.0
        %1140 = vmatpush1.msra.mxu0 0.0
        %1141 = vmatprep.subr.mxu0 0.0
        %1142 = vmatpush1.msra.mxu0 0.0
        %1143 = vmatprep.subr.mxu0 0.0
        %1144 = vmatpush1.msra.mxu0 0.0
        %1145 = vmatprep.subr.mxu0 0.0
        %1146 = vmatpush1.msra.mxu0 0.0
        %1147 = vmatprep.subr.mxu0 0.0
        %1148 = vmatpush1.msra.mxu0 0.0
        %1149 = vmatprep.subr.mxu0 0.0
        %1150 = vmatpush1.msra.mxu0 0.0
        %1151 = vmatprep.subr.mxu0 0.0
        %1152 = vmatpush1.msra.mxu0 0.0
        %1153 = vmatprep.subr.mxu0 0.0
        %1154 = vmatpush1.msra.mxu0 0.0
        %1155 = vmatprep.subr.mxu0 0.0
        %1156 = vmatpush1.msra.mxu0 0.0
        %1157 = vmatprep.subr.mxu0 0.0
        %1158 = vmatpush1.msra.mxu0 0.0
        %1159 = vmatprep.subr.mxu0 0.0
        %1160 = vmatpush1.msra.mxu0 0.0
        %1161 = vmatprep.subr.mxu0 0.0
        %1162 = vmatpush1.msra.mxu0 0.0
        %1163 = vmatprep.subr.mxu0 0.0
        %1164 = vmatpush1.msra.mxu0 0.0
        %1165 = vmatprep.subr.mxu0 0.0
        %1166 = vmatpush1.msra.mxu0 0.0
        %1167 = vmatprep.subr.mxu0 0.0
        %1168 = vmatpush1.msra.mxu0 0.0
        %1169 = vmatprep.subr.mxu0 0.0
        %1170 = vmatpush1.msra.mxu0 0.0
        %1171 = vmatprep.subr.mxu0 0.0
        %1172 = vmatpush1.msra.mxu0 0.0
        %1173 = vmatprep.subr.mxu0 0.0
        %1174 = vmatpush1.msra.mxu0 0.0
        %1175 = vmatprep.subr.mxu0 0.0
        %1176 = vmatpush1.msra.mxu0 0.0
        %1177 = vmatprep.subr.mxu0 0.0
        %1178 = vmatpush1.msra.mxu0 0.0
        %1179 = vmatprep.subr.mxu0 0.0
        %1180 = vmatpush1.msra.mxu0 0.0
        %1181 = vmatprep.subr.mxu0 0.0
        %1182 = vmatpush1.msra.mxu0 0.0
        %1183 = vmatprep.subr.mxu0 0.0
        %1184 = vmatpush1.msra.mxu0 0.0
        %1185 = vmatprep.subr.mxu0 0.0
        %1186 = vmatpush1.msra.mxu0 0.0
        %1187 = vmatprep.subr.mxu0 0.0
        %1188 = vmatpush1.msra.mxu0 0.0
        %1189 = vmatprep.subr.mxu0 0.0
        %1190 = vmatpush1.msra.mxu0 0.0
        %1191 = vmatprep.subr.mxu0 0.0
        %1192 = vmatpush1.msra.mxu0 0.0
        %1193 = vmatprep.subr.mxu0 0.0
        %1194 = vmatpush1.msra.mxu0 0.0
        %1195 = vmatprep.subr.mxu0 0.0
        %1196 = vmatpush1.msra.mxu0 0.0
        %1197 = vmatprep.subr.mxu0 0.0
        %1198 = vmatpush1.msra.mxu0 0.0
        %1199 = vmatprep.mubr.f32.mxu0 0.0
        %v1200 = vand.u32 %v822, 4294901760
        %v1201 = vsub.f32 %v822, %v1200
        %v1202 = vand.u32 %v1201, 4294901760
        %1203 = vmatmul.mubr.f32.gmra.mrb[0].mxu0 %v1202
        %v1204 = vpop.f32.mrb[0].mxu0
        %v1205 = vadd.f32 %v1109, %v1204
        %v1206 = vpop.f32.mrb[0].mxu0
        %1207 = vmatprep.mubr.f32.mxu0 0.0
        %v1208 = vand.u32 %v824, 4294901760
        %v1209 = vsub.f32 %v824, %v1208
        %v1210 = vand.u32 %v1209, 4294901760
        %1211 = vmatmul.mubr.f32.gmra.mrb[0].mxu0 %v1210
        %v1212 = vpop.f32.mrb[0].mxu0
        %v1213 = vadd.f32 %v1116, %v1212
        %v1214 = vpop.f32.mrb[0].mxu0
        %1215 = vmatprep.mubr.f32.mxu0 0.0
        %v1216 = vand.u32 %v826, 4294901760
        %v1217 = vsub.f32 %v826, %v1216
        %v1218 = vand.u32 %v1217, 4294901760
        %1219 = vmatmul.mubr.f32.gmra.mrb[0].mxu0 %v1218
        %v1220 = vpop.f32.mrb[0].mxu0
        %v1221 = vadd.f32 %v1123, %v1220
        %v1222 = vpop.f32.mrb[0].mxu0
        %1223 = vmatprep.mubr.f32.mxu0 0.0
        %v1224 = vand.u32 %v828, 4294901760
        %v1225 = vsub.f32 %v828, %v1224
        %v1226 = vand.u32 %v1225, 4294901760
        %1227 = vmatmul.mubr.f32.gmra.mrb[0].mxu0 %v1226
        %v1228 = vpop.f32.mrb[0].mxu0
        %v1229 = vadd.f32 %v1130, %v1228
        %v1230 = vpop.f32.mrb[0].mxu0
        %1231 = vdwg.mxu0
        %1232 = vmatprep.subr.mxu0 0.0
        %v1233 = vand.u32 %v211, 4294901760
        %v1234 = vsub.f32 %v211, %v1233
        %v1235 = vand.u32 %v1234, 4294901760
        %1236 = vmatpush1.msra.mxu0 %v1235
        %1237 = vmatprep.subr.mxu0 0.0
        %v1238 = vand.u32 %v212, 4294901760
        %v1239 = vsub.f32 %v212, %v1238
        %v1240 = vand.u32 %v1239, 4294901760
        %1241 = vmatpush1.msra.mxu0 %v1240
        %1242 = vmatprep.subr.mxu0 0.0
        %1243 = vmatpush1.msra.mxu0 0.0
        %1244 = vmatprep.subr.mxu0 0.0
        %1245 = vmatpush1.msra.mxu0 0.0
        %1246 = vmatprep.subr.mxu0 0.0
        %1247 = vmatpush1.msra.mxu0 0.0
        %1248 = vmatprep.subr.mxu0 0.0
        %1249 = vmatpush1.msra.mxu0 0.0
        %1250 = vmatprep.subr.mxu0 0.0
        %1251 = vmatpush1.msra.mxu0 0.0
        %1252 = vmatprep.subr.mxu0 0.0
        %1253 = vmatpush1.msra.mxu0 0.0
        %1254 = vmatprep.subr.mxu0 0.0
        %1255 = vmatpush1.msra.mxu0 0.0
        %1256 = vmatprep.subr.mxu0 0.0
        %1257 = vmatpush1.msra.mxu0 0.0
        %1258 = vmatprep.subr.mxu0 0.0
        %1259 = vmatpush1.msra.mxu0 0.0
        %1260 = vmatprep.subr.mxu0 0.0
        %1261 = vmatpush1.msra.mxu0 0.0
        %1262 = vmatprep.subr.mxu0 0.0
        %1263 = vmatpush1.msra.mxu0 0.0
        %1264 = vmatprep.subr.mxu0 0.0
        %1265 = vmatpush1.msra.mxu0 0.0
        %1266 = vmatprep.subr.mxu0 0.0
        %1267 = vmatpush1.msra.mxu0 0.0
        %1268 = vmatprep.subr.mxu0 0.0
        %1269 = vmatpush1.msra.mxu0 0.0
        %1270 = vmatprep.subr.mxu0 0.0
        %1271 = vmatpush1.msra.mxu0 0.0
        %1272 = vmatprep.subr.mxu0 0.0
        %1273 = vmatpush1.msra.mxu0 0.0
        %1274 = vmatprep.subr.mxu0 0.0
        %1275 = vmatpush1.msra.mxu0 0.0
        %1276 = vmatprep.subr.mxu0 0.0
        %1277 = vmatpush1.msra.mxu0 0.0
        %1278 = vmatprep.subr.mxu0 0.0
        %1279 = vmatpush1.msra.mxu0 0.0
        %1280 = vmatprep.subr.mxu0 0.0
        %1281 = vmatpush1.msra.mxu0 0.0
        %1282 = vmatprep.subr.mxu0 0.0
        %1283 = vmatpush1.msra.mxu0 0.0
        %1284 = vmatprep.subr.mxu0 0.0
        %1285 = vmatpush1.msra.mxu0 0.0
        %1286 = vmatprep.subr.mxu0 0.0
        %1287 = vmatpush1.msra.mxu0 0.0
        %1288 = vmatprep.subr.mxu0 0.0
        %1289 = vmatpush1.msra.mxu0 0.0
        %1290 = vmatprep.subr.mxu0 0.0
        %1291 = vmatpush1.msra.mxu0 0.0
        %1292 = vmatprep.subr.mxu0 0.0
        %1293 = vmatpush1.msra.mxu0 0.0
        %1294 = vmatprep.subr.mxu0 0.0
        %1295 = vmatpush1.msra.mxu0 0.0
        %1296 = vmatprep.subr.mxu0 0.0
        %1297 = vmatpush1.msra.mxu0 0.0
        %1298 = vmatprep.subr.mxu0 0.0
        %1299 = vmatpush1.msra.mxu0 0.0
        %1300 = vmatprep.subr.mxu0 0.0
        %1301 = vmatpush1.msra.mxu0 0.0
        %1302 = vmatprep.mubr.f32.mxu0 0.0
        %v1303 = vand.u32 %v822, 4294901760
        %1304 = vmatmul.mubr.f32.gmra.mrb[0].mxu0 %v1303
        %v1305 = vpop.f32.mrb[0].mxu0
        %v1306 = vadd.f32 %v1205, %v1305
        %v1307 = vpop.f32.mrb[0].mxu0
        %1308 = vmatprep.mubr.f32.mxu0 0.0
        %v1309 = vand.u32 %v824, 4294901760
        %1310 = vmatmul.mubr.f32.gmra.mrb[0].mxu0 %v1309
        %v1311 = vpop.f32.mrb[0].mxu0
        %v1312 = vadd.f32 %v1213, %v1311
        %v1313 = vpop.f32.mrb[0].mxu0
        %1314 = vmatprep.mubr.f32.mxu0 0.0
        %v1315 = vand.u32 %v826, 4294901760
        %1316 = vmatmul.mubr.f32.gmra.mrb[0].mxu0 %v1315
        %v1317 = vpop.f32.mrb[0].mxu0
        %v1318 = vadd.f32 %v1221, %v1317
        %v1319 = vpop.f32.mrb[0].mxu0
        %1320 = vmatprep.mubr.f32.mxu0 0.0
        %v1321 = vand.u32 %v828, 4294901760
        %1322 = vmatmul.mubr.f32.gmra.mrb[0].mxu0 %v1321
        %v1323 = vpop.f32.mrb[0].mxu0
        %v1324 = vadd.f32 %v1229, %v1323
        %v1325 = vpop.f32.mrb[0].mxu0
        %1326 = vdwg.mxu0
        %1327 = vmatprep.subr.mxu0 0.0
        %v1328 = vand.u32 %v211, 4294901760
        %1329 = vmatpush1.msra.mxu0 %v1328
        %1330 = vmatprep.subr.mxu0 0.0
        %v1331 = vand.u32 %v212, 4294901760
        %1332 = vmatpush1.msra.mxu0 %v1331
        %1333 = vmatprep.subr.mxu0 0.0
        %1334 = vmatpush1.msra.mxu0 0.0
        %1335 = vmatprep.subr.mxu0 0.0
        %1336 = vmatpush1.msra.mxu0 0.0
        %1337 = vmatprep.subr.mxu0 0.0
        %1338 = vmatpush1.msra.mxu0 0.0
        %1339 = vmatprep.subr.mxu0 0.0
        %1340 = vmatpush1.msra.mxu0 0.0
        %1341 = vmatprep.subr.mxu0 0.0
        %1342 = vmatpush1.msra.mxu0 0.0
        %1343 = vmatprep.subr.mxu0 0.0
        %1344 = vmatpush1.msra.mxu0 0.0
        %1345 = vmatprep.subr.mxu0 0.0
        %1346 = vmatpush1.msra.mxu0 0.0
        %1347 = vmatprep.subr.mxu0 0.0
        %1348 = vmatpush1.msra.mxu0 0.0
        %1349 = vmatprep.subr.mxu0 0.0
        %1350 = vmatpush1.msra.mxu0 0.0
        %1351 = vmatprep.subr.mxu0 0.0
        %1352 = vmatpush1.msra.mxu0 0.0
        %1353 = vmatprep.subr.mxu0 0.0
        %1354 = vmatpush1.msra.mxu0 0.0
        %1355 = vmatprep.subr.mxu0 0.0
        %1356 = vmatpush1.msra.mxu0 0.0
        %1357 = vmatprep.subr.mxu0 0.0
        %1358 = vmatpush1.msra.mxu0 0.0
        %1359 = vmatprep.subr.mxu0 0.0
        %1360 = vmatpush1.msra.mxu0 0.0
        %1361 = vmatprep.subr.mxu0 0.0
        %1362 = vmatpush1.msra.mxu0 0.0
        %1363 = vmatprep.subr.mxu0 0.0
        %1364 = vmatpush1.msra.mxu0 0.0
        %1365 = vmatprep.subr.mxu0 0.0
        %1366 = vmatpush1.msra.mxu0 0.0
        %1367 = vmatprep.subr.mxu0 0.0
        %1368 = vmatpush1.msra.mxu0 0.0
        %1369 = vmatprep.subr.mxu0 0.0
        %1370 = vmatpush1.msra.mxu0 0.0
        %1371 = vmatprep.subr.mxu0 0.0
        %1372 = vmatpush1.msra.mxu0 0.0
        %1373 = vmatprep.subr.mxu0 0.0
        %1374 = vmatpush1.msra.mxu0 0.0
        %1375 = vmatprep.subr.mxu0 0.0
        %1376 = vmatpush1.msra.mxu0 0.0
        %1377 = vmatprep.subr.mxu0 0.0
        %1378 = vmatpush1.msra.mxu0 0.0
        %1379 = vmatprep.subr.mxu0 0.0
        %1380 = vmatpush1.msra.mxu0 0.0
        %1381 = vmatprep.subr.mxu0 0.0
        %1382 = vmatpush1.msra.mxu0 0.0
        %1383 = vmatprep.subr.mxu0 0.0
        %1384 = vmatpush1.msra.mxu0 0.0
        %1385 = vmatprep.subr.mxu0 0.0
        %1386 = vmatpush1.msra.mxu0 0.0
        %1387 = vmatprep.subr.mxu0 0.0
        %1388 = vmatpush1.msra.mxu0 0.0
        %1389 = vmatprep.subr.mxu0 0.0
        %1390 = vmatpush1.msra.mxu0 0.0
        %1391 = vmatprep.subr.mxu0 0.0
        %1392 = vmatpush1.msra.mxu0 0.0
        %1393 = vmatprep.mubr.f32.mxu0 0.0
        %v1394 = vand.u32 %v822, 4294901760
        %1395 = vmatmul.mubr.f32.gmra.mrb[0].mxu0 %v1394
        %v1396 = vpop.f32.mrb[0].mxu0
        %v1397 = vadd.f32 %v1306, %v1396
        %v1398 = vpop.f32.mrb[0].mxu0
        %1399 = vmatprep.mubr.f32.mxu0 0.0
        %v1400 = vand.u32 %v824, 4294901760
        %1401 = vmatmul.mubr.f32.gmra.mrb[0].mxu0 %v1400
        %v1402 = vpop.f32.mrb[0].mxu0
        %v1403 = vadd.f32 %v1312, %v1402
        %v1404 = vpop.f32.mrb[0].mxu0
        %1405 = vmatprep.mubr.f32.mxu0 0.0
        %v1406 = vand.u32 %v826, 4294901760
        %1407 = vmatmul.mubr.f32.gmra.mrb[0].mxu0 %v1406
        %v1408 = vpop.f32.mrb[0].mxu0
        %v1409 = vadd.f32 %v1318, %v1408
        %v1410 = vpop.f32.mrb[0].mxu0
        %1411 = vmatprep.mubr.f32.mxu0 0.0
        %v1412 = vand.u32 %v828, 4294901760
        %1413 = vmatmul.mubr.f32.gmra.mrb[0].mxu0 %v1412
        %v1414 = vpop.f32.mrb[0].mxu0
        %v1415 = vadd.f32 %v1324, %v1414
        %v1416 = vpop.f32.mrb[0].mxu0
        %1417 = vdwg.mxu0
        %vm1418 = vcmask 64512
        %1419 = vst.msk [vmem:[%s205] sm:$0xff] %vm1418, %v793
        %1420 = vst.msk [vmem:[%s205 + $0x8] sm:$0xff] %vm1418, %v799
        %1421 = vst.msk [vmem:[%s205 + $0x10] sm:$0xff] %vm1418, %v805
        %1422 = vst.msk [vmem:[%s205 + $0x18] sm:$0xff] %vm1418, %v811
        %s1423 = scalar_lea.vmem %s205, 32
        %1424 = vst.msk [vmem:[%s1423] sm:$0xff] %vm1418, %v1397
        %1425 = vst.msk [vmem:[%s1423 + $0x8] sm:$0xff] %vm1418, %v1403
        %1426 = vst.msk [vmem:[%s1423 + $0x10] sm:$0xff] %vm1418, %v1409
        %1427 = vst.msk [vmem:[%s1423 + $0x18] sm:$0xff] %vm1418, %v1415
        %1432 = vrot.lane.b32.xlu0 %v793, 120
        %v1433 = vpop.permute.xlu0 %1432
        %1434 = vrot.lane.b32.xlu0 %v799, 120
        %v1435 = vpop.permute.xlu0 %1434
        %1436 = vrot.lane.b32.xlu0 %v805, 120
        %v1437 = vpop.permute.xlu0 %1436
        %1438 = vrot.lane.b32.xlu0 %v811, 120
        %v1439 = vpop.permute.xlu0 %1438
        %s1444 = scalar_lea.vmem %s205, 64
        %1445 = vst.msk [vmem:[%s1444] sm:$0xff] %vm1418, %v1433
        %1446 = vst.msk [vmem:[%s1444 + $0x8] sm:$0xff] %vm1418, %v1435
        %1447 = vst.msk [vmem:[%s1444 + $0x10] sm:$0xff] %vm1418, %v1437
        %1448 = vst.msk [vmem:[%s1444 + $0x18] sm:$0xff] %vm1418, %v1439
        %1453 = vrot.lane.b32.xlu0 %v1397, 120
        %v1454 = vpop.permute.xlu0 %1453
        %1455 = vrot.lane.b32.xlu0 %v1403, 120
        %v1456 = vpop.permute.xlu0 %1455
        %1457 = vrot.lane.b32.xlu0 %v1409, 120
        %v1458 = vpop.permute.xlu0 %1457
        %1459 = vrot.lane.b32.xlu0 %v1415, 120
        %v1460 = vpop.permute.xlu0 %1459
        %s1465 = scalar_lea.vmem %s205, 96
        %1466 = vst.msk [vmem:[%s1465] sm:$0xff] %vm1418, %v1454
        %1467 = vst.msk [vmem:[%s1465 + $0x8] sm:$0xff] %vm1418, %v1456
        %1468 = vst.msk [vmem:[%s1465 + $0x10] sm:$0xff] %vm1418, %v1458
        %1469 = vst.msk [vmem:[%s1465 + $0x18] sm:$0xff] %vm1418, %v1460
        %s1470 = smul.u32 4, %s22
        %p1471 = scmp.lt.s32.totalorder %s21, 1
        %s1472 = scalar_select %p1471, %s21, 1
        %p1473 = scmp.lt.s32.totalorder %s1470, 3
        %s1474 = scalar_select %p1473, %s1470, 3
        %s1475 = smul.addr %s1472, 16
        %s1476 = sadd.s32 %s1474, %s1475
        %s1477 = smul.addr %s1476, 8
        %s1478 = scalar_lea.vmem %s2, %s1477
        // Predicated region
        $region37: #{tpu_custom_call.1} parent=27 // pred_check
          %p1479 = pneg %p98
        $region38: #{tpu_custom_call.1} parent=27 // pred_check_branch
          %1481 = sbr.rel (%p1479) target = $region40
        $region39: #{tpu_custom_call.1} parent=27 // pred_region
          %s1482 = smul.u32 4, %s22
        $region40: #{tpu_custom_call.1} parent=27 // pred_fallthru
          _
      $region28: #{tpu_custom_call.1} parent=5 // pred_fallthru
        _
      %p1483 = scmp.le.s32.totalorder 2, %s12
      // Predicated region
      $region41: #{tpu_custom_call.1} parent=5 // pred_check
        %p1484 = pneg %p1483
      $region42: #{tpu_custom_call.1} parent=5 // pred_check_branch
        %1486 = sbr.rel (%p1484) target = $region44
      $region43: #{tpu_custom_call.1} parent=5 // pred_region
        %s1487 = ssub.s32 %s12, 2
        // Predicated region
        $region45: #{tpu_custom_call.1} parent=43 // pred_check
          %p1488 = pneg %p104
        $region46: #{tpu_custom_call.1} parent=43 // pred_check_branch
          %1490 = sbr.rel (%p1488) target = $region48
        $region47: #{tpu_custom_call.1} parent=43 // pred_region
          %s1491 = smul.u32 4, %s24
          %p1492 = scmp.lt.s32.totalorder %s23, 1
          %s1493 = scalar_select %p1492, %s23, 1
          %p1494 = scmp.lt.s32.totalorder %s1491, 3
          %s1495 = scalar_select %p1494, %s1491, 3
          %s1496 = smul.addr %s1493, 16
          %s1497 = sadd.s32 %s1495, %s1496
          %s1498 = smul.addr %s1497, 8
          %s1499 = scalar_lea.vmem %s2, %s1498
        $region48: #{tpu_custom_call.1} parent=43 // pred_fallthru
          _
      $region44: #{tpu_custom_call.1} parent=5 // pred_fallthru
        _
    $region6: #{tpu_custom_call.1} parent=1 // loop_footer
      %s16 = sadd.s32 1, %s12
    $region7: #{tpu_custom_call.1} parent=1 // loop_footer_branch
      %11 = sbr.rel target = $region3
    $region8: #{tpu_custom_call.1} parent=1 // loop_exit
      _
    %1500 = vsyncpa [#allocation3], 1
    %s1501 = scalar_lea.sflag [#allocation3], 1
    %1502 = vsyncpa %s1501, 1
    %1503 = vsyncpa [#allocation5], 1

</llo_original>
